<compile_context>
chip_gen: v7x
topology: tpu7x:2x2x1
jax: 0.10.0
libtpu: 0.0.40
codegen_flags: <defaults>
</compile_context>

<pallas_src>
import jax
import jax.numpy as jnp
from jax import lax
from jax.experimental import pallas as pl
from jax.experimental.pallas import tpu as pltpu


def _round_up(a, m):
    return ((a + m - 1) // m) * m


def _vmem_cap_bytes():
    try:
        return int(pltpu.get_tpu_info().vmem_capacity_bytes)
    except Exception:
        return 64 << 20  # conservative (v7x per-TC VMEM)


def _choose_batch_tile(batch, target):
    """Pick (tile, padded_batch): tile is a multiple of 128, <= target.

    Priorities: minimise padding waste, keep >= 2 grid steps when the batch
    allows it (megacore on v7x), then prefer fewer/fatter steps."""
    target = max(128, _round_up(target, 128))
    best = None
    tile = 128
    while tile <= target:
        b_pad = _round_up(batch, tile)
        grid = b_pad // tile
        waste = b_pad - batch
        single_step_penalty = 1 if (grid < 2 and batch > 128) else 0
        key = (waste, single_step_penalty, grid)
        if best is None or key < best[0]:
            best = (key, tile, b_pad)
        tile += 128
    return best[1], best[2]


def make_ffn_kernel(n_hidden, residual_connection, global_residual_connection,
                    scale, mxu_dtype):
    """Kernel body for a fixed static configuration.

    refs = (x_ref, W0t, b0, [Wh_stack, bh_stack if n_hidden>1], Wft, bf, out_ref)
    Activations are feature-major: (features, batch_tile), batch on lanes.
    Weights arrive pre-transformed (ELU hoisted), pre-transposed to (dout, din),
    pre-cast to mxu_dtype; biases are f32 (dout, 1). Hidden weights are stacked
    as (L, H, H) / (L, H, 1).
    """
    n_mid = n_hidden - 1

    def kernel(*refs):
        if n_mid > 0:
            x_ref, w0_ref, b0_ref, wh_ref, bh_ref, wf_ref, bf_ref, out_ref = refs
        else:
            x_ref, w0_ref, b0_ref, wf_ref, bf_ref, out_ref = refs
            wh_ref = bh_ref = None

        xin = x_ref[...]                              # (in, bt); f32 only if needed
        x_mx = xin.astype(mxu_dtype)

        # --- initial block: Linear -> ReLU (no residual around it) ---
        proc = jnp.dot(w0_ref[...], x_mx,
                       preferred_element_type=jnp.float32) + b0_ref[...]
        proc = jnp.maximum(proc, 0.0)
        # TODO(synk): training-mode dropout RNG not implemented (dropout=0 -> identity)

        # --- hidden blocks: flat list [Linear, ReLU] * (n_hidden - 1) ---
        if n_mid > 0:
            def body(i, p):
                lin = jnp.dot(wh_ref[i], p.astype(mxu_dtype),
                              preferred_element_type=jnp.float32) + bh_ref[i]
                if residual_connection:
                    p = p + lin                       # proc = proc + Linear(proc)
                    p = p + jnp.maximum(p, 0.0)       # proc = proc + ReLU(proc)
                else:
                    p = jnp.maximum(lin, 0.0)
                return p
            proc = lax.fori_loop(0, n_mid, body, proc, unroll=(n_mid <= 4))

        # --- final linear (no activation) ---
        out = jnp.dot(wf_ref[...], proc.astype(mxu_dtype),
                      preferred_element_type=jnp.float32) + bf_ref[...]

        if global_residual_connection:
            out = xin.astype(jnp.float32) + out
        if scale is not None:
            out = scale * out

        out_ref[...] = out.astype(out_ref.dtype)

    return kernel


def base_ffn_pallas(x, params, *, n_hidden, positive_linear, leak,
                    residual_connection, global_residual_connection, scale,
                    batch_tile=None, mxu_dtype=jnp.bfloat16):
    """x: (B, in_size); params: flat [W0, b0, (Wh_i, bh_i)..., Wf, bf],
    weights (din, dout) like nn.Linear's x @ W + b, biases (1, dout)."""
    B, in_size = x.shape
    hidden_size = params[0].shape[1]
    out_size = params[-1].shape[-1]
    if global_residual_connection and out_size != in_size:
        raise ValueError("global_residual_connection requires out_size == in_size")

    vmem_cap = _vmem_cap_bytes()
    if batch_tile is None:
        # Fatter tiles on 128-MiB chips (v5e/v6e), smaller default on v7x.
        batch_tile = 1024 if vmem_cap >= (100 << 20) else 512
    bt, b_pad = _choose_batch_tile(B, batch_tile)

    # --- hoist the ELU weight transform; pre-transpose / pre-cast weights ---
    def tw(w):
        w = jnp.asarray(w, jnp.float32)
        if positive_linear:
            w = jax.nn.elu(w) + 1.0 - leak            # ELULinear weight transform
        return w.T.astype(mxu_dtype)                  # (dout, din)

    def tb(b):
        return jnp.asarray(b, jnp.float32).reshape(-1, 1)

    w0, b0 = tw(params[0]), tb(params[1])
    wf, bf = tw(params[-2]), tb(params[-1])
    n_mid = n_hidden - 1
    if n_mid > 0:
        wh = jnp.stack([tw(params[2 + 2 * i]) for i in range(n_mid)])  # (L, H, H)
        bh = jnp.stack([tb(params[3 + 2 * i]) for i in range(n_mid)])  # (L, H, 1)
        weight_args = (w0, b0, wh, bh, wf, bf)
    else:
        weight_args = (w0, b0, wf, bf)

    # x is only needed in f32 inside the kernel when the global residual uses it.
    x_in_dtype = jnp.float32 if global_residual_connection else mxu_dtype
    out_dtype = x.dtype
    x_t = jnp.pad(x.T.astype(x_in_dtype), ((0, 0), (0, b_pad - B)))   # (in, b_pad)

    kernel = make_ffn_kernel(n_hidden, residual_connection,
                             global_residual_connection, scale, mxu_dtype)

    weight_bytes = sum(int(p.size) * p.dtype.itemsize for p in weight_args)
    macs = (in_size * hidden_size + n_mid * hidden_size * hidden_size
            + hidden_size * out_size)
    cost = pl.CostEstimate(
        flops=2 * b_pad * macs,
        transcendentals=0,
        bytes_accessed=int(x_t.size) * x_t.dtype.itemsize
        + out_size * b_pad * jnp.dtype(out_dtype).itemsize + weight_bytes)

    def run(single_buffer_weights):
        in_specs = [pl.BlockSpec((in_size, bt), lambda i: (0, i))]
        for p in weight_args:
            idx_map = (lambda i, nd=p.ndim: (0,) * nd)
            if single_buffer_weights:
                spec = pl.BlockSpec(p.shape, idx_map,
                                    pipeline_mode=pl.Buffered(buffer_count=1))
            else:
                spec = pl.BlockSpec(p.shape, idx_map)
            in_specs.append(spec)

        # VMEM budget: resident weights (+x1 or x2 buffering), double-buffered
        # x/out tiles, and a rough allowance for live f32 intermediates.
        io_bytes = 2 * (in_size * bt * jnp.dtype(x_in_dtype).itemsize
                        + out_size * bt * jnp.dtype(out_dtype).itemsize)
        act_bytes = 6 * hidden_size * bt * 4
        needed = ((1 if single_buffer_weights else 2) * weight_bytes
                  + io_bytes + act_bytes)
        vmem_limit = int(min(max(2 * needed, 8 << 20), int(0.9 * vmem_cap)))

        return pl.pallas_call(
            kernel,
            out_shape=jax.ShapeDtypeStruct((out_size, b_pad), out_dtype),
            grid_spec=pltpu.PrefetchScalarGridSpec(
                num_scalar_prefetch=0,
                grid=(b_pad // bt,),
                in_specs=in_specs,
                out_specs=pl.BlockSpec((out_size, bt), lambda i: (0, i)),
            ),
            compiler_params=pltpu.CompilerParams(
                dimension_semantics=("parallel",),
                vmem_limit_bytes=vmem_limit),
            cost_estimate=cost,
        )(x_t, *weight_args)

    try:
        out_t = run(single_buffer_weights=True)
        out_t.block_until_ready()
    except Exception:
        # Fallback for builds that reject single-buffered (Buffered(1)) inputs.
        out_t = run(single_buffer_weights=False)

    return out_t[:, :B].T


def base_ffn_reference(x, params, *, n_hidden, positive_linear, leak,
                       residual_connection, global_residual_connection, scale,
                       mxu_dtype=None):
    """Pure-JAX reference mirroring BaseFFN.forward.

    If mxu_dtype is given, matmul inputs are cast to it (f32 accumulation),
    mirroring the kernel's MXU path; elementwise math stays f32."""
    def tw(w):
        if positive_linear:
            w = jax.nn.elu(w) + 1.0 - leak
        return w.astype(mxu_dtype) if mxu_dtype is not None else w

    def dot(a, w):
        a = a.astype(mxu_dtype) if mxu_dtype is not None else a
        return jnp.dot(a, w, preferred_element_type=jnp.float32)

    w0, b0 = params[0], params[1]
    proc = dot(x, tw(w0)) + b0
    proc = jnp.maximum(proc, 0.0)
    for i in range(n_hidden - 1):
        w, b = params[2 + 2 * i], params[3 + 2 * i]
        lin = dot(proc, tw(w)) + b
        if residual_connection:
            proc = proc + lin
            proc = proc + jnp.maximum(proc, 0.0)
        else:
            proc = jnp.maximum(lin, 0.0)
    wf, bf = params[-2], params[-1]
    out = dot(proc, tw(wf)) + bf
    if global_residual_connection:
        out = x + out
    if scale is not None:
        out = scale * out
    return out


def init_params(key, in_size, hidden_size, n_hidden, out_size):
    """Deterministic synthetic init (shapes match BaseFFN.__init__)."""
    params = []
    dims = [(in_size, hidden_size)] + \
           [(hidden_size, hidden_size)] * (n_hidden - 1) + \
           [(hidden_size, out_size)]
    for (din, dout) in dims:
        key, kw, kb = jax.random.split(key, 3)
        bound = 1.0 / jnp.sqrt(din)
        w = jax.random.uniform(kw, (din, dout), jnp.float32, -bound, bound)
        b = jax.random.uniform(kb, (1, dout), jnp.float32, -0.1, 0.1)
        params.extend([w, b])
    return params


if __name__ == "__main__":
    B, IN, HID, NH = 256, 32, 64, 3
    OUT = IN  # required by global_residual_connection
    cfg = dict(
        n_hidden=NH,
        positive_linear=True,
        leak=0.01,
        residual_connection=True,
        global_residual_connection=True,
        scale=0.5,
    )

    key = jax.random.PRNGKey(0)
    key, kx, kp2 = jax.random.split(key, 3)
    x = jax.random.normal(kx, (B, IN), jnp.float32)
    params = init_params(key, IN, HID, NH, OUT)

    # Fast path: bf16 MXU inputs, f32 accumulation / elementwise.
    out_bf16 = base_ffn_pallas(x, params, mxu_dtype=jnp.bfloat16, **cfg)
    out_bf16 = jax.block_until_ready(out_bf16)
    assert out_bf16.shape == (B, OUT)
    ref_bf16 = base_ffn_reference(x, params, mxu_dtype=jnp.bfloat16, **cfg)
    assert jnp.allclose(out_bf16, ref_bf16, rtol=1e-3, atol=1e-2), \
        f"bf16 path max err {jnp.max(jnp.abs(out_bf16 - ref_bf16))}"

    # f32 MXU path vs pure-f32 reference (near-exact; f32 matmul is multi-pass).
    out_f32 = base_ffn_pallas(x, params, mxu_dtype=jnp.float32, **cfg)
    out_f32 = jax.block_until_ready(out_f32)
    ref_f32 = base_ffn_reference(x, params, mxu_dtype=None, **cfg)
    assert jnp.allclose(out_f32, ref_f32, rtol=1e-3, atol=1e-2), \
        f"f32 path max err {jnp.max(jnp.abs(out_f32 - ref_f32))}"

    # Plain-Linear config: no residuals, n_hidden=1, different out_size,
    # exercising the bf16 x-DMA path (no global residual) and the no-stack branch.
    cfg2 = dict(
        n_hidden=1,
        positive_linear=False,
        leak=0.01,
        residual_connection=False,
        global_residual_connection=False,
        scale=None,
    )
    params2 = init_params(kp2, IN, HID, 1, 48)
    out2 = base_ffn_pallas(x, params2, mxu_dtype=jnp.bfloat16, **cfg2)
    out2 = jax.block_until_ready(out2)
    assert out2.shape == (B, 48)
    ref2 = base_ffn_reference(x, params2, mxu_dtype=jnp.bfloat16, **cfg2)
    assert jnp.allclose(out2, ref2, rtol=1e-3, atol=1e-2), \
        f"cfg2 path max err {jnp.max(jnp.abs(out2 - ref2))}"

    print("KERNEL_OK")
</pallas_src>

<mosaic_0001>
module attributes {stable_mosaic.version = 11 : i64} {
  func.func @kernel(%arg0: i32, %arg1: memref<32x128xf32, #tpu.memory_space<vmem>>, %arg2: memref<64x32xbf16, #tpu.memory_space<vmem>>, %arg3: memref<64x1xf32, #tpu.memory_space<vmem>>, %arg4: memref<2x64x64xbf16, #tpu.memory_space<vmem>>, %arg5: memref<2x64x1xf32, #tpu.memory_space<vmem>>, %arg6: memref<32x64xbf16, #tpu.memory_space<vmem>>, %arg7: memref<32x1xf32, #tpu.memory_space<vmem>>, %arg8: memref<32x128xf32, #tpu.memory_space<vmem>>) attributes {dimension_semantics = [#tpu.dimension_semantics<parallel>], iteration_bounds = array<i64: 2>, scalar_prefetch = 0 : i64, scratch_operands = 0 : i64, tpu.core_type = #tpu.core_type<tc>, window_params = [{transform_indices = @transform_0, window_bounds = array<i64: 32, 128>}, {pipeline_mode = #tpu.pipeline_mode<synchronous>, transform_indices = @transform_1, window_bounds = array<i64: 64, 32>}, {pipeline_mode = #tpu.pipeline_mode<synchronous>, transform_indices = @transform_2, window_bounds = array<i64: 64, 1>}, {pipeline_mode = #tpu.pipeline_mode<synchronous>, transform_indices = @transform_3, window_bounds = array<i64: 2, 64, 64>}, {pipeline_mode = #tpu.pipeline_mode<synchronous>, transform_indices = @transform_4, window_bounds = array<i64: 2, 64, 1>}, {pipeline_mode = #tpu.pipeline_mode<synchronous>, transform_indices = @transform_5, window_bounds = array<i64: 32, 64>}, {pipeline_mode = #tpu.pipeline_mode<synchronous>, transform_indices = @transform_6, window_bounds = array<i64: 32, 1>}, {transform_indices = @transform_7, window_bounds = array<i64: 32, 128>}]} {
    %c0 = arith.constant 0 : index
    %c0_0 = arith.constant 0 : index
    %0 = vector.load %arg1[%c0, %c0_0] : memref<32x128xf32, #tpu.memory_space<vmem>>, vector<32x128xf32>
    %1 = arith.truncf %0 : vector<32x128xf32> to vector<32x128xbf16>
    %c0_1 = arith.constant 0 : index
    %c0_2 = arith.constant 0 : index
    %2 = vector.load %arg2[%c0_1, %c0_2] : memref<64x32xbf16, #tpu.memory_space<vmem>>, vector<64x32xbf16>
    %cst = arith.constant dense<0.000000e+00> : vector<64x128xf32>
    %3 = tpu.matmul %2, %1, %cst {dimension_numbers = #tpu.dot_dimension_numbers<[1], [0], [0], [1], [0, 0, 1, 1], [], []>} : vector<64x32xbf16>, vector<32x128xbf16>, vector<64x128xf32> -> vector<64x128xf32>
    %c0_3 = arith.constant 0 : index
    %c0_4 = arith.constant 0 : index
    %4 = vector.load %arg3[%c0_3, %c0_4] : memref<64x1xf32, #tpu.memory_space<vmem>>, vector<64x1xf32>
    %5 = vector.broadcast %4 : vector<64x1xf32> to vector<64x128xf32>
    %6 = arith.addf %3, %5 : vector<64x128xf32>
    %cst_5 = arith.constant 0.000000e+00 : f32
    %7 = vector.broadcast %cst_5 : f32 to vector<64x128xf32>
    %8 = arith.maximumf %6, %7 : vector<64x128xf32>
    %c0_i32 = arith.constant 0 : i32
    %9 = arith.index_cast %c0_i32 : i32 to index
    %c0_6 = arith.constant 0 : index
    %c0_7 = arith.constant 0 : index
    %10 = vector.load %arg4[%9, %c0_6, %c0_7] : memref<2x64x64xbf16, #tpu.memory_space<vmem>>, vector<1x64x64xbf16>
    %11 = vector.shape_cast %10 : vector<1x64x64xbf16> to vector<64x64xbf16>
    %12 = arith.truncf %8 : vector<64x128xf32> to vector<64x128xbf16>
    %cst_8 = arith.constant dense<0.000000e+00> : vector<64x128xf32>
    %13 = tpu.matmul %11, %12, %cst_8 {dimension_numbers = #tpu.dot_dimension_numbers<[1], [0], [0], [1], [0, 0, 1, 1], [], []>} : vector<64x64xbf16>, vector<64x128xbf16>, vector<64x128xf32> -> vector<64x128xf32>
    %14 = arith.index_cast %c0_i32 : i32 to index
    %c0_9 = arith.constant 0 : index
    %c0_10 = arith.constant 0 : index
    %15 = vector.load %arg5[%14, %c0_9, %c0_10] : memref<2x64x1xf32, #tpu.memory_space<vmem>>, vector<1x64x1xf32>
    %16 = vector.shape_cast %15 : vector<1x64x1xf32> to vector<64x1xf32>
    %17 = vector.broadcast %16 : vector<64x1xf32> to vector<64x128xf32>
    %18 = arith.addf %13, %17 : vector<64x128xf32>
    %19 = arith.addf %8, %18 : vector<64x128xf32>
    %cst_11 = arith.constant 0.000000e+00 : f32
    %20 = vector.broadcast %cst_11 : f32 to vector<64x128xf32>
    %21 = arith.maximumf %19, %20 : vector<64x128xf32>
    %22 = arith.addf %19, %21 : vector<64x128xf32>
    %c1_i32 = arith.constant 1 : i32
    %23 = arith.index_cast %c1_i32 : i32 to index
    %c0_12 = arith.constant 0 : index
    %c0_13 = arith.constant 0 : index
    %24 = vector.load %arg4[%23, %c0_12, %c0_13] : memref<2x64x64xbf16, #tpu.memory_space<vmem>>, vector<1x64x64xbf16>
    %25 = vector.shape_cast %24 : vector<1x64x64xbf16> to vector<64x64xbf16>
    %26 = arith.truncf %22 : vector<64x128xf32> to vector<64x128xbf16>
    %cst_14 = arith.constant dense<0.000000e+00> : vector<64x128xf32>
    %27 = tpu.matmul %25, %26, %cst_14 {dimension_numbers = #tpu.dot_dimension_numbers<[1], [0], [0], [1], [0, 0, 1, 1], [], []>} : vector<64x64xbf16>, vector<64x128xbf16>, vector<64x128xf32> -> vector<64x128xf32>
    %28 = arith.index_cast %c1_i32 : i32 to index
    %c0_15 = arith.constant 0 : index
    %c0_16 = arith.constant 0 : index
    %29 = vector.load %arg5[%28, %c0_15, %c0_16] : memref<2x64x1xf32, #tpu.memory_space<vmem>>, vector<1x64x1xf32>
    %30 = vector.shape_cast %29 : vector<1x64x1xf32> to vector<64x1xf32>
    %31 = vector.broadcast %30 : vector<64x1xf32> to vector<64x128xf32>
    %32 = arith.addf %27, %31 : vector<64x128xf32>
    %33 = arith.addf %22, %32 : vector<64x128xf32>
    %cst_17 = arith.constant 0.000000e+00 : f32
    %34 = vector.broadcast %cst_17 : f32 to vector<64x128xf32>
    %35 = arith.maximumf %33, %34 : vector<64x128xf32>
    %36 = arith.addf %33, %35 : vector<64x128xf32>
    %c2_i32 = arith.constant 2 : i32
    %c0_18 = arith.constant 0 : index
    %c0_19 = arith.constant 0 : index
    %37 = vector.load %arg6[%c0_18, %c0_19] : memref<32x64xbf16, #tpu.memory_space<vmem>>, vector<32x64xbf16>
    %38 = arith.truncf %36 : vector<64x128xf32> to vector<64x128xbf16>
    %cst_20 = arith.constant dense<0.000000e+00> : vector<32x128xf32>
    %39 = tpu.matmul %37, %38, %cst_20 {dimension_numbers = #tpu.dot_dimension_numbers<[1], [0], [0], [1], [0, 0, 1, 1], [], []>} : vector<32x64xbf16>, vector<64x128xbf16>, vector<32x128xf32> -> vector<32x128xf32>
    %c0_21 = arith.constant 0 : index
    %c0_22 = arith.constant 0 : index
    %40 = vector.load %arg7[%c0_21, %c0_22] : memref<32x1xf32, #tpu.memory_space<vmem>>, vector<32x1xf32>
    %41 = vector.broadcast %40 : vector<32x1xf32> to vector<32x128xf32>
    %42 = arith.addf %39, %41 : vector<32x128xf32>
    %43 = arith.addf %0, %42 : vector<32x128xf32>
    %cst_23 = arith.constant 5.000000e-01 : f32
    %44 = vector.broadcast %cst_23 : f32 to vector<32x128xf32>
    %45 = arith.mulf %44, %43 : vector<32x128xf32>
    %c0_24 = arith.constant 0 : index
    %c0_25 = arith.constant 0 : index
    %46 = vector.load %arg8[%c0_24, %c0_25] : memref<32x128xf32, #tpu.memory_space<vmem>>, vector<32x128xf32>
    tpu.vector_store %arg8[%c0_24, %c0_25], %45 {strides = array<i32>} : memref<32x128xf32, #tpu.memory_space<vmem>>, vector<32x128xf32>,
    return
  }
  func.func @transform_0(%arg0: i32) -> (i32, i32) {
    %c0_i32 = arith.constant 0 : i32
    %c0_i32_0 = arith.constant 0 : i32
    return %c0_i32, %arg0 : i32, i32
  }
  func.func @transform_1(%arg0: i32) -> (i32, i32) {
    %c0_i32 = arith.constant 0 : i32
    %c0_i32_0 = arith.constant 0 : i32
    %c0_i32_1 = arith.constant 0 : i32
    return %c0_i32, %c0_i32_0 : i32, i32
  }
  func.func @transform_2(%arg0: i32) -> (i32, i32) {
    %c0_i32 = arith.constant 0 : i32
    %c0_i32_0 = arith.constant 0 : i32
    %c0_i32_1 = arith.constant 0 : i32
    return %c0_i32, %c0_i32_0 : i32, i32
  }
  func.func @transform_3(%arg0: i32) -> (i32, i32, i32) {
    %c0_i32 = arith.constant 0 : i32
    %c0_i32_0 = arith.constant 0 : i32
    %c0_i32_1 = arith.constant 0 : i32
    %c0_i32_2 = arith.constant 0 : i32
    return %c0_i32, %c0_i32_0, %c0_i32_1 : i32, i32, i32
  }
  func.func @transform_4(%arg0: i32) -> (i32, i32, i32) {
    %c0_i32 = arith.constant 0 : i32
    %c0_i32_0 = arith.constant 0 : i32
    %c0_i32_1 = arith.constant 0 : i32
    %c0_i32_2 = arith.constant 0 : i32
    return %c0_i32, %c0_i32_0, %c0_i32_1 : i32, i32, i32
  }
  func.func @transform_5(%arg0: i32) -> (i32, i32) {
    %c0_i32 = arith.constant 0 : i32
    %c0_i32_0 = arith.constant 0 : i32
    %c0_i32_1 = arith.constant 0 : i32
    return %c0_i32, %c0_i32_0 : i32, i32
  }
  func.func @transform_6(%arg0: i32) -> (i32, i32) {
    %c0_i32 = arith.constant 0 : i32
    %c0_i32_0 = arith.constant 0 : i32
    %c0_i32_1 = arith.constant 0 : i32
    return %c0_i32, %c0_i32_0 : i32, i32
  }
  func.func @transform_7(%arg0: i32) -> (i32, i32) {
    %c0_i32 = arith.constant 0 : i32
    %c0_i32_0 = arith.constant 0 : i32
    return %c0_i32, %arg0 : i32, i32
  }
}

module attributes {stable_mosaic.version = 11 : i64} {
  func.func @kernel(%arg0: i32, %arg1: memref<32x128xf32, #tpu.memory_space<vmem>>, %arg2: memref<64x32xbf16, #tpu.memory_space<vmem>>, %arg3: memref<64x1xf32, #tpu.memory_space<vmem>>, %arg4: memref<2x64x64xbf16, #tpu.memory_space<vmem>>, %arg5: memref<2x64x1xf32, #tpu.memory_space<vmem>>, %arg6: memref<32x64xbf16, #tpu.memory_space<vmem>>, %arg7: memref<32x1xf32, #tpu.memory_space<vmem>>, %arg8: memref<32x128xf32, #tpu.memory_space<vmem>>) attributes {dimension_semantics = [#tpu.dimension_semantics<parallel>], iteration_bounds = array<i64: 2>, scalar_prefetch = 0 : i64, scratch_operands = 0 : i64, tpu.core_type = #tpu.core_type<tc>, window_params = [{transform_indices = @transform_0, window_bounds = array<i64: 32, 128>}, {pipeline_mode = #tpu.pipeline_mode<synchronous>, transform_indices = @transform_1, window_bounds = array<i64: 64, 32>}, {pipeline_mode = #tpu.pipeline_mode<synchronous>, transform_indices = @transform_2, window_bounds = array<i64: 64, 1>}, {pipeline_mode = #tpu.pipeline_mode<synchronous>, transform_indices = @transform_3, window_bounds = array<i64: 2, 64, 64>}, {pipeline_mode = #tpu.pipeline_mode<synchronous>, transform_indices = @transform_4, window_bounds = array<i64: 2, 64, 1>}, {pipeline_mode = #tpu.pipeline_mode<synchronous>, transform_indices = @transform_5, window_bounds = array<i64: 32, 64>}, {pipeline_mode = #tpu.pipeline_mode<synchronous>, transform_indices = @transform_6, window_bounds = array<i64: 32, 1>}, {transform_indices = @transform_7, window_bounds = array<i64: 32, 128>}]} {
    %c0 = arith.constant 0 : index
    %c0_0 = arith.constant 0 : index
    %0 = vector.load %arg1[%c0, %c0_0] : memref<32x128xf32, #tpu.memory_space<vmem>>, vector<32x128xf32>
    %1 = arith.truncf %0 : vector<32x128xf32> to vector<32x128xbf16>
    %c0_1 = arith.constant 0 : index
    %c0_2 = arith.constant 0 : index
    %2 = vector.load %arg2[%c0_1, %c0_2] : memref<64x32xbf16, #tpu.memory_space<vmem>>, vector<64x32xbf16>
    %cst = arith.constant dense<0.000000e+00> : vector<64x128xf32>
    %3 = tpu.matmul %2, %1, %cst {dimension_numbers = #tpu.dot_dimension_numbers<[1], [0], [0], [1], [0, 0, 1, 1], [], []>} : vector<64x32xbf16>, vector<32x128xbf16>, vector<64x128xf32> -> vector<64x128xf32>
    %c0_3 = arith.constant 0 : index
    %c0_4 = arith.constant 0 : index
    %4 = vector.load %arg3[%c0_3, %c0_4] : memref<64x1xf32, #tpu.memory_space<vmem>>, vector<64x1xf32>
    %5 = vector.broadcast %4 : vector<64x1xf32> to vector<64x128xf32>
    %6 = arith.addf %3, %5 : vector<64x128xf32>
    %cst_5 = arith.constant 0.000000e+00 : f32
    %7 = vector.broadcast %cst_5 : f32 to vector<64x128xf32>
    %8 = arith.maximumf %6, %7 : vector<64x128xf32>
    %c0_i32 = arith.constant 0 : i32
    %9 = arith.index_cast %c0_i32 : i32 to index
    %c0_6 = arith.constant 0 : index
    %c0_7 = arith.constant 0 : index
    %10 = vector.load %arg4[%9, %c0_6, %c0_7] : memref<2x64x64xbf16, #tpu.memory_space<vmem>>, vector<1x64x64xbf16>
    %11 = vector.shape_cast %10 : vector<1x64x64xbf16> to vector<64x64xbf16>
    %12 = arith.truncf %8 : vector<64x128xf32> to vector<64x128xbf16>
    %cst_8 = arith.constant dense<0.000000e+00> : vector<64x128xf32>
    %13 = tpu.matmul %11, %12, %cst_8 {dimension_numbers = #tpu.dot_dimension_numbers<[1], [0], [0], [1], [0, 0, 1, 1], [], []>} : vector<64x64xbf16>, vector<64x128xbf16>, vector<64x128xf32> -> vector<64x128xf32>
    %14 = arith.index_cast %c0_i32 : i32 to index
    %c0_9 = arith.constant 0 : index
    %c0_10 = arith.constant 0 : index
    %15 = vector.load %arg5[%14, %c0_9, %c0_10] : memref<2x64x1xf32, #tpu.memory_space<vmem>>, vector<1x64x1xf32>
    %16 = vector.shape_cast %15 : vector<1x64x1xf32> to vector<64x1xf32>
    %17 = vector.broadcast %16 : vector<64x1xf32> to vector<64x128xf32>
    %18 = arith.addf %13, %17 : vector<64x128xf32>
    %19 = arith.addf %8, %18 : vector<64x128xf32>
    %cst_11 = arith.constant 0.000000e+00 : f32
    %20 = vector.broadcast %cst_11 : f32 to vector<64x128xf32>
    %21 = arith.maximumf %19, %20 : vector<64x128xf32>
    %22 = arith.addf %19, %21 : vector<64x128xf32>
    %c1_i32 = arith.constant 1 : i32
    %23 = arith.index_cast %c1_i32 : i32 to index
    %c0_12 = arith.constant 0 : index
    %c0_13 = arith.constant 0 : index
    %24 = vector.load %arg4[%23, %c0_12, %c0_13] : memref<2x64x64xbf16, #tpu.memory_space<vmem>>, vector<1x64x64xbf16>
    %25 = vector.shape_cast %24 : vector<1x64x64xbf16> to vector<64x64xbf16>
    %26 = arith.truncf %22 : vector<64x128xf32> to vector<64x128xbf16>
    %cst_14 = arith.constant dense<0.000000e+00> : vector<64x128xf32>
    %27 = tpu.matmul %25, %26, %cst_14 {dimension_numbers = #tpu.dot_dimension_numbers<[1], [0], [0], [1], [0, 0, 1, 1], [], []>} : vector<64x64xbf16>, vector<64x128xbf16>, vector<64x128xf32> -> vector<64x128xf32>
    %28 = arith.index_cast %c1_i32 : i32 to index
    %c0_15 = arith.constant 0 : index
    %c0_16 = arith.constant 0 : index
    %29 = vector.load %arg5[%28, %c0_15, %c0_16] : memref<2x64x1xf32, #tpu.memory_space<vmem>>, vector<1x64x1xf32>
    %30 = vector.shape_cast %29 : vector<1x64x1xf32> to vector<64x1xf32>
    %31 = vector.broadcast %30 : vector<64x1xf32> to vector<64x128xf32>
    %32 = arith.addf %27, %31 : vector<64x128xf32>
    %33 = arith.addf %22, %32 : vector<64x128xf32>
    %cst_17 = arith.constant 0.000000e+00 : f32
    %34 = vector.broadcast %cst_17 : f32 to vector<64x128xf32>
    %35 = arith.maximumf %33, %34 : vector<64x128xf32>
    %36 = arith.addf %33, %35 : vector<64x128xf32>
    %c2_i32 = arith.constant 2 : i32
    %c0_18 = arith.constant 0 : index
    %c0_19 = arith.constant 0 : index
    %37 = vector.load %arg6[%c0_18, %c0_19] : memref<32x64xbf16, #tpu.memory_space<vmem>>, vector<32x64xbf16>
    %38 = arith.truncf %36 : vector<64x128xf32> to vector<64x128xbf16>
    %cst_20 = arith.constant dense<0.000000e+00> : vector<32x128xf32>
    %39 = tpu.matmul %37, %38, %cst_20 {dimension_numbers = #tpu.dot_dimension_numbers<[1], [0], [0], [1], [0, 0, 1, 1], [], []>} : vector<32x64xbf16>, vector<64x128xbf16>, vector<32x128xf32> -> vector<32x128xf32>
    %c0_21 = arith.constant 0 : index
    %c0_22 = arith.constant 0 : index
    %40 = vector.load %arg7[%c0_21, %c0_22] : memref<32x1xf32, #tpu.memory_space<vmem>>, vector<32x1xf32>
    %41 = vector.broadcast %40 : vector<32x1xf32> to vector<32x128xf32>
    %42 = arith.addf %39, %41 : vector<32x128xf32>
    %43 = arith.addf %0, %42 : vector<32x128xf32>
    %cst_23 = arith.constant 5.000000e-01 : f32
    %44 = vector.broadcast %cst_23 : f32 to vector<32x128xf32>
    %45 = arith.mulf %44, %43 : vector<32x128xf32>
    %c0_24 = arith.constant 0 : index
    %c0_25 = arith.constant 0 : index
    %46 = vector.load %arg8[%c0_24, %c0_25] : memref<32x128xf32, #tpu.memory_space<vmem>>, vector<32x128xf32>
    tpu.vector_store %arg8[%c0_24, %c0_25], %45 {strides = array<i32>} : memref<32x128xf32, #tpu.memory_space<vmem>>, vector<32x128xf32>,
    return
  }
  func.func @transform_0(%arg0: i32) -> (i32, i32) {
    %c0_i32 = arith.constant 0 : i32
    %c0_i32_0 = arith.constant 0 : i32
    return %c0_i32, %arg0 : i32, i32
  }
  func.func @transform_1(%arg0: i32) -> (i32, i32) {
    %c0_i32 = arith.constant 0 : i32
    %c0_i32_0 = arith.constant 0 : i32
    %c0_i32_1 = arith.constant 0 : i32
    return %c0_i32, %c0_i32_0 : i32, i32
  }
  func.func @transform_2(%arg0: i32) -> (i32, i32) {
    %c0_i32 = arith.constant 0 : i32
    %c0_i32_0 = arith.constant 0 : i32
    %c0_i32_1 = arith.constant 0 : i32
    return %c0_i32, %c0_i32_0 : i32, i32
  }
  func.func @transform_3(%arg0: i32) -> (i32, i32, i32) {
    %c0_i32 = arith.constant 0 : i32
    %c0_i32_0 = arith.constant 0 : i32
    %c0_i32_1 = arith.constant 0 : i32
    %c0_i32_2 = arith.constant 0 : i32
    return %c0_i32, %c0_i32_0, %c0_i32_1 : i32, i32, i32
  }
  func.func @transform_4(%arg0: i32) -> (i32, i32, i32) {
    %c0_i32 = arith.constant 0 : i32
    %c0_i32_0 = arith.constant 0 : i32
    %c0_i32_1 = arith.constant 0 : i32
    %c0_i32_2 = arith.constant 0 : i32
    return %c0_i32, %c0_i32_0, %c0_i32_1 : i32, i32, i32
  }
  func.func @transform_5(%arg0: i32) -> (i32, i32) {
    %c0_i32 = arith.constant 0 : i32
    %c0_i32_0 = arith.constant 0 : i32
    %c0_i32_1 = arith.constant 0 : i32
    return %c0_i32, %c0_i32_0 : i32, i32
  }
  func.func @transform_6(%arg0: i32) -> (i32, i32) {
    %c0_i32 = arith.constant 0 : i32
    %c0_i32_0 = arith.constant 0 : i32
    %c0_i32_1 = arith.constant 0 : i32
    return %c0_i32, %c0_i32_0 : i32, i32
  }
  func.func @transform_7(%arg0: i32) -> (i32, i32) {
    %c0_i32 = arith.constant 0 : i32
    %c0_i32_0 = arith.constant 0 : i32
    return %c0_i32, %arg0 : i32, i32
  }
}

</mosaic_0001>

<llo_original>
// kernel: tpu_custom_call.1
$region0: #{tpu_custom_call.1}
  #allocation0 [shape = 'u32[]', space=smem, size = 0x4, offset = 0x4, fixed_abs, tag = 'smem constant byte address 0x4 - core index']
  #allocation1 [shape = 'u32[144,128]{1,0:T(1,128)}', space=vmem, size = 0x12000, scoped, tag = 'internal scratch']
  %s0 = inlined_call_operand.vmem [shape: f32[32,256], index: 0, kind: input, shape index: {}]
  %s1 = inlined_call_operand.vmem [shape: bf16[64,32], index: 1, kind: input, shape index: {}]
  %s2 = inlined_call_operand.vmem [shape: f32[64,1], index: 2, kind: input, shape index: {}]
  %s3 = inlined_call_operand.vmem [shape: bf16[2,64,64], index: 3, kind: input, shape index: {}]
  %s4 = inlined_call_operand.vmem [shape: f32[2,64,1], index: 4, kind: input, shape index: {}]
  %s5 = inlined_call_operand.vmem [shape: bf16[32,64], index: 5, kind: input, shape index: {}]
  %s6 = inlined_call_operand.vmem [shape: f32[32,1], index: 6, kind: input, shape index: {}]
  %s7 = inlined_call_operand.hbm [shape: f32[32,256], index: 7, kind: output, shape index: {}]
  %s8 = sld [smem:[#allocation0]]
  $region99: #{tpu_custom_call.1} parent=0
    _
  %s10 = ssub.s32 1, %s8
  %s11 = scalar_select 0, %s10, %s8
  $region1: #{tpu_custom_call.1} parent=0
    #allocation2 [shape = 'u8[32768]{0}', space=vmem, size = 0x8000, scoped, tag = 'input window, operand 0']
    #allocation3 [shape = 'u8[32768]{0}', space=vmem, size = 0x8000, scoped, tag = 'output window, operand 0']
    #allocation4 [shape = 's32[2]{0}', space=sflag, size = 0x8, scoped, tag = 'scoped memory for tpu_custom_call.1']
    %12 = vsyncpa [#allocation4], 0
    %s13 = scalar_lea.sflag [#allocation4], 1
    %14 = vsyncpa %s13, 0
    loop: start=0, step=1, limit=4
    $region2: #{tpu_custom_call.1} parent=1 // loop_pre_header
      _
    $region3: #{tpu_custom_call.1} parent=1 // loop_header
      %s16 = sphi 0, %s20
      %p17 = scmp.ge.s32.totalorder %s16, 4
      %s26 = sphi 0, %s28
      %s29 = sphi 0, %s26
      %s30 = sphi 0, %s29
      %s46 = sphi 0, %s30
      %s50 = sphi 0, %s50
      %s52 = sphi 0, %s50
      %s53 = sphi 0, %s52
      %s67 = sphi 0, %s53
      %s71 = sphi 0, %s71
      %s73 = sphi 0, %s71
      %s74 = sphi 0, %s73
      %s88 = sphi 0, %s74
      %s92 = sphi 0, %s92
      %s94 = sphi 0, %s92
      %s95 = sphi 0, %s94
      %s109 = sphi 0, %s95
      %s113 = sphi 0, %s113
      %s115 = sphi 0, %s113
      %s116 = sphi 0, %s115
      %s130 = sphi 0, %s116
      %s134 = sphi 0, %s134
      %s136 = sphi 0, %s134
      %s137 = sphi 0, %s136
      %s151 = sphi 0, %s137
      %s155 = sphi 0, %s155
      %s157 = sphi 0, %s155
      %s158 = sphi 0, %s157
      %s172 = sphi 0, %s158
      %s178 = sphi 0, %s180
      %s181 = sphi 0, %s178
      %s182 = sphi 0, %s181
      %s198 = sphi 0, %s182
    $region4: #{tpu_custom_call.1} parent=1 // loop_header_branch
      %19 = sbr.rel (%p17) target = $region8
    $region5: #{tpu_custom_call.1} parent=1 // loop_body
      %s21 = ssub.s32 %s16, 1
      %s22 = ssub.s32 %s16, 2
      %s23 = sadd.s32 %s16, 1
      %s24 = ssub.s32 %s16, %s23
      %p25 = scmp.eq.s32.totalorder %s24, 0
      %s27 = sadd.s32 %s26, 1
      %s28 = scalar_select %p25, %s26, %s27
      %p31 = pneg %p25
      %p32 = scmp.eq.s32.totalorder %s16, 1
      %p33 = por %p31, %p32
      %p34 = scmp.ne.s32.totalorder %s26, %s29
      %p35 = scmp.eq.s32.totalorder %s16, 0
      %p36 = por %p34, %p35
      %p37 = scmp.ne.s32.totalorder %s26, %s29
      %p38 = scmp.eq.s32.totalorder %s21, 1
      %p39 = por %p37, %p38
      %p40 = scmp.ne.s32.totalorder %s29, %s30
      %p41 = scmp.eq.s32.totalorder %s21, 0
      %p42 = por %p40, %p41
      %p43 = scmp.ne.s32.totalorder %s29, %s30
      %p44 = scmp.eq.s32.totalorder %s22, 1
      %p45 = por %p43, %p44
      %p47 = scmp.ne.s32.totalorder %s30, %s46
      %p48 = scmp.eq.s32.totalorder %s22, 0
      %p49 = por %p47, %p48
      %s51 = sadd.s32 %s50, 1
      %p54 = scmp.eq.s32.totalorder %s16, 1
      %p55 = scmp.ne.s32.totalorder %s50, %s52
      %p56 = scmp.eq.s32.totalorder %s16, 0
      %p57 = por %p55, %p56
      %p58 = scmp.ne.s32.totalorder %s50, %s52
      %p59 = scmp.eq.s32.totalorder %s21, 1
      %p60 = por %p58, %p59
      %p61 = scmp.ne.s32.totalorder %s52, %s53
      %p62 = scmp.eq.s32.totalorder %s21, 0
      %p63 = por %p61, %p62
      %p64 = scmp.ne.s32.totalorder %s52, %s53
      %p65 = scmp.eq.s32.totalorder %s22, 1
      %p66 = por %p64, %p65
      %p68 = scmp.ne.s32.totalorder %s53, %s67
      %p69 = scmp.eq.s32.totalorder %s22, 0
      %p70 = por %p68, %p69
      %s72 = sadd.s32 %s71, 1
      %p75 = scmp.eq.s32.totalorder %s16, 1
      %p76 = scmp.ne.s32.totalorder %s71, %s73
      %p77 = scmp.eq.s32.totalorder %s16, 0
      %p78 = por %p76, %p77
      %p79 = scmp.ne.s32.totalorder %s71, %s73
      %p80 = scmp.eq.s32.totalorder %s21, 1
      %p81 = por %p79, %p80
      %p82 = scmp.ne.s32.totalorder %s73, %s74
      %p83 = scmp.eq.s32.totalorder %s21, 0
      %p84 = por %p82, %p83
      %p85 = scmp.ne.s32.totalorder %s73, %s74
      %p86 = scmp.eq.s32.totalorder %s22, 1
      %p87 = por %p85, %p86
      %p89 = scmp.ne.s32.totalorder %s74, %s88
      %p90 = scmp.eq.s32.totalorder %s22, 0
      %p91 = por %p89, %p90
      %s93 = sadd.s32 %s92, 1
      %p96 = scmp.eq.s32.totalorder %s16, 1
      %p97 = scmp.ne.s32.totalorder %s92, %s94
      %p98 = scmp.eq.s32.totalorder %s16, 0
      %p99 = por %p97, %p98
      %p100 = scmp.ne.s32.totalorder %s92, %s94
      %p101 = scmp.eq.s32.totalorder %s21, 1
      %p102 = por %p100, %p101
      %p103 = scmp.ne.s32.totalorder %s94, %s95
      %p104 = scmp.eq.s32.totalorder %s21, 0
      %p105 = por %p103, %p104
      %p106 = scmp.ne.s32.totalorder %s94, %s95
      %p107 = scmp.eq.s32.totalorder %s22, 1
      %p108 = por %p106, %p107
      %p110 = scmp.ne.s32.totalorder %s95, %s109
      %p111 = scmp.eq.s32.totalorder %s22, 0
      %p112 = por %p110, %p111
      %s114 = sadd.s32 %s113, 1
      %p117 = scmp.eq.s32.totalorder %s16, 1
      %p118 = scmp.ne.s32.totalorder %s113, %s115
      %p119 = scmp.eq.s32.totalorder %s16, 0
      %p120 = por %p118, %p119
      %p121 = scmp.ne.s32.totalorder %s113, %s115
      %p122 = scmp.eq.s32.totalorder %s21, 1
      %p123 = por %p121, %p122
      %p124 = scmp.ne.s32.totalorder %s115, %s116
      %p125 = scmp.eq.s32.totalorder %s21, 0
      %p126 = por %p124, %p125
      %p127 = scmp.ne.s32.totalorder %s115, %s116
      %p128 = scmp.eq.s32.totalorder %s22, 1
      %p129 = por %p127, %p128
      %p131 = scmp.ne.s32.totalorder %s116, %s130
      %p132 = scmp.eq.s32.totalorder %s22, 0
      %p133 = por %p131, %p132
      %s135 = sadd.s32 %s134, 1
      %p138 = scmp.eq.s32.totalorder %s16, 1
      %p139 = scmp.ne.s32.totalorder %s134, %s136
      %p140 = scmp.eq.s32.totalorder %s16, 0
      %p141 = por %p139, %p140
      %p142 = scmp.ne.s32.totalorder %s134, %s136
      %p143 = scmp.eq.s32.totalorder %s21, 1
      %p144 = por %p142, %p143
      %p145 = scmp.ne.s32.totalorder %s136, %s137
      %p146 = scmp.eq.s32.totalorder %s21, 0
      %p147 = por %p145, %p146
      %p148 = scmp.ne.s32.totalorder %s136, %s137
      %p149 = scmp.eq.s32.totalorder %s22, 1
      %p150 = por %p148, %p149
      %p152 = scmp.ne.s32.totalorder %s137, %s151
      %p153 = scmp.eq.s32.totalorder %s22, 0
      %p154 = por %p152, %p153
      %s156 = sadd.s32 %s155, 1
      %p159 = scmp.eq.s32.totalorder %s16, 1
      %p160 = scmp.ne.s32.totalorder %s155, %s157
      %p161 = scmp.eq.s32.totalorder %s16, 0
      %p162 = por %p160, %p161
      %p163 = scmp.ne.s32.totalorder %s155, %s157
      %p164 = scmp.eq.s32.totalorder %s21, 1
      %p165 = por %p163, %p164
      %p166 = scmp.ne.s32.totalorder %s157, %s158
      %p167 = scmp.eq.s32.totalorder %s21, 0
      %p168 = por %p166, %p167
      %p169 = scmp.ne.s32.totalorder %s157, %s158
      %p170 = scmp.eq.s32.totalorder %s22, 1
      %p171 = por %p169, %p170
      %p173 = scmp.ne.s32.totalorder %s158, %s172
      %p174 = scmp.eq.s32.totalorder %s22, 0
      %p175 = por %p173, %p174
      %s176 = ssub.s32 %s16, %s23
      %p177 = scmp.eq.s32.totalorder %s176, 0
      %s179 = sadd.s32 %s178, 1
      %s180 = scalar_select %p177, %s178, %s179
      %p183 = pneg %p177
      %p184 = scmp.eq.s32.totalorder %s16, 1
      %p185 = por %p183, %p184
      %p186 = scmp.ne.s32.totalorder %s178, %s181
      %p187 = scmp.eq.s32.totalorder %s16, 0
      %p188 = por %p186, %p187
      %p189 = scmp.ne.s32.totalorder %s178, %s181
      %p190 = scmp.eq.s32.totalorder %s21, 1
      %p191 = por %p189, %p190
      %p192 = scmp.ne.s32.totalorder %s181, %s182
      %p193 = scmp.eq.s32.totalorder %s21, 0
      %p194 = por %p192, %p193
      %p195 = scmp.ne.s32.totalorder %s181, %s182
      %p196 = scmp.eq.s32.totalorder %s22, 1
      %p197 = por %p195, %p196
      %p199 = scmp.ne.s32.totalorder %s182, %s198
      %p200 = scmp.eq.s32.totalorder %s22, 0
      %p201 = por %p199, %p200
      %p202 = scmp.le.s32.totalorder 1, %s16
      %p203 = scmp.lt.s32.totalorder %s16, 3
      %p204 = pnand %p202, %p203
      %p205 = pneg %p204
      // Predicated region
      $region9: #{tpu_custom_call.1} parent=5 // pred_check
        _
      $region10: #{tpu_custom_call.1} parent=5 // pred_check_branch
        %207 = sbr.rel (%p204) target = $region12
      $region11: #{tpu_custom_call.1} parent=5 // pred_region
        %s208 = ssub.s32 %s16, 1
        // Predicated region
        $region13: #{tpu_custom_call.1} parent=11 // pred_check
          %p209 = pneg %p63
        $region14: #{tpu_custom_call.1} parent=11 // pred_check_branch
          %211 = sbr.rel (%p209) target = $region16
        $region15: #{tpu_custom_call.1} parent=11 // pred_region
          _
        $region16: #{tpu_custom_call.1} parent=11 // pred_fallthru
          _
        // Predicated region
        $region17: #{tpu_custom_call.1} parent=11 // pred_check
          %p212 = pneg %p84
        $region18: #{tpu_custom_call.1} parent=11 // pred_check_branch
          %214 = sbr.rel (%p212) target = $region20
        $region19: #{tpu_custom_call.1} parent=11 // pred_region
          _
        $region20: #{tpu_custom_call.1} parent=11 // pred_fallthru
          _
        // Predicated region
        $region21: #{tpu_custom_call.1} parent=11 // pred_check
          %p215 = pneg %p105
        $region22: #{tpu_custom_call.1} parent=11 // pred_check_branch
          %217 = sbr.rel (%p215) target = $region24
        $region23: #{tpu_custom_call.1} parent=11 // pred_region
          _
        $region24: #{tpu_custom_call.1} parent=11 // pred_fallthru
          _
        // Predicated region
        $region25: #{tpu_custom_call.1} parent=11 // pred_check
          %p218 = pneg %p126
        $region26: #{tpu_custom_call.1} parent=11 // pred_check_branch
          %220 = sbr.rel (%p218) target = $region28
        $region27: #{tpu_custom_call.1} parent=11 // pred_region
          _
        $region28: #{tpu_custom_call.1} parent=11 // pred_fallthru
          _
        // Predicated region
        $region29: #{tpu_custom_call.1} parent=11 // pred_check
          %p221 = pneg %p147
        $region30: #{tpu_custom_call.1} parent=11 // pred_check_branch
          %223 = sbr.rel (%p221) target = $region32
        $region31: #{tpu_custom_call.1} parent=11 // pred_region
          _
        $region32: #{tpu_custom_call.1} parent=11 // pred_fallthru
          _
        // Predicated region
        $region33: #{tpu_custom_call.1} parent=11 // pred_check
          %p224 = pneg %p168
        $region34: #{tpu_custom_call.1} parent=11 // pred_check_branch
          %226 = sbr.rel (%p224) target = $region36
        $region35: #{tpu_custom_call.1} parent=11 // pred_region
          _
        $region36: #{tpu_custom_call.1} parent=11 // pred_fallthru
          _
      $region12: #{tpu_custom_call.1} parent=5 // pred_fallthru
        _
      %p227 = scmp.lt.s32.totalorder %s16, 2
      // Predicated region
      $region37: #{tpu_custom_call.1} parent=5 // pred_check
        %p228 = pneg %p227
      $region38: #{tpu_custom_call.1} parent=5 // pred_check_branch
        %230 = sbr.rel (%p228) target = $region40
      $region39: #{tpu_custom_call.1} parent=5 // pred_region
        // Predicated region
        $region41: #{tpu_custom_call.1} parent=39 // pred_check
          %p231 = pneg %p36
        $region42: #{tpu_custom_call.1} parent=39 // pred_check_branch
          %233 = sbr.rel (%p231) target = $region44
        $region43: #{tpu_custom_call.1} parent=39 // pred_region
          %s234 = sand.u32 %s26, 1
          %s235 = sand.u32 %s26, 1
          %s236 = smul.addr %s235, 32
          %s237 = scalar_lea.vmem [#allocation2], %s236
          %s238 = smul.addr %s16, 8
          %s239 = scalar_lea.vmem %s0, %s238
          // Predicated region
          $region45: #{tpu_custom_call.1} parent=43 // pred_check
            _
          $region46: #{tpu_custom_call.1} parent=43 // pred_check_branch
            %241 = sbr.rel (0) target = $region48
          $region47: #{tpu_custom_call.1} parent=43 // pred_region
            // Predicated region
            $region49: #{tpu_custom_call.1} parent=47 // pred_check
              _
            $region50: #{tpu_custom_call.1} parent=47 // pred_check_branch
              %243 = sbr.rel (0) target = $region52
            $region51: #{tpu_custom_call.1} parent=47 // pred_region
              // Predicated region
              $region64: #{tpu_custom_call.1} parent=51 // pred_check
                _
              $region65: #{tpu_custom_call.1} parent=51 // pred_check_branch
                %264 = sbr.rel (0) target = $region67
              $region66: #{tpu_custom_call.1} parent=51 // pred_region
                loop: start=0, step=1, limit=1
                $region68: #{tpu_custom_call.1} parent=66 // loop_pre_header
                  _
                $region69: #{tpu_custom_call.1} parent=66 // loop_header
                  %s266 = sphi 0, %s270
                  %p267 = scmp.ge.s32.totalorder %s266, 1
                  %s271 = sphi %s239, %s239
                  %s272 = sphi %s237, %s237
                $region70: #{tpu_custom_call.1} parent=66 // loop_header_branch
                  %269 = sbr.rel (%p267) target = $region74
                $region71: #{tpu_custom_call.1} parent=66 // loop_body
                  %v273 = vld [vmem:[%s271] sm:$0xff]
                  %274 = vst [vmem:[%s272] sm:$0xff] %v273
                  %v275 = vld [vmem:[%s271 + $0x10] sm:$0xff]
                  %276 = vst [vmem:[%s272 + $0x8] sm:$0xff] %v275
                  %v277 = vld [vmem:[%s271 + $0x20] sm:$0xff]
                  %278 = vst [vmem:[%s272 + $0x10] sm:$0xff] %v277
                  %v279 = vld [vmem:[%s271 + $0x30] sm:$0xff]
                  %280 = vst [vmem:[%s272 + $0x18] sm:$0xff] %v279
                $region72: #{tpu_custom_call.1} parent=66 // loop_footer
                  %s270 = sadd.s32 1, %s266
                $region73: #{tpu_custom_call.1} parent=66 // loop_footer_branch
                  %265 = sbr.rel target = $region69
                $region74: #{tpu_custom_call.1} parent=66 // loop_exit
                  _
              $region67: #{tpu_custom_call.1} parent=51 // pred_fallthru
                _
              // Predicated region
              $region75: #{tpu_custom_call.1} parent=51 // pred_check
                _
              $region76: #{tpu_custom_call.1} parent=51 // pred_check_branch
                %282 = sbr.rel target = $region78
              $region77: #{tpu_custom_call.1} parent=51 // pred_region
                _
              $region78: #{tpu_custom_call.1} parent=51 // pred_fallthru
                _
            $region52: #{tpu_custom_call.1} parent=47 // pred_fallthru
              _
            // Predicated region
            $region53: #{tpu_custom_call.1} parent=47 // pred_check
              _
            $region54: #{tpu_custom_call.1} parent=47 // pred_check_branch
              %245 = sbr.rel target = $region56
            $region55: #{tpu_custom_call.1} parent=47 // pred_region
              loop: start=0, step=1, limit=1
              $region57: #{tpu_custom_call.1} parent=55 // loop_pre_header
                _
              $region58: #{tpu_custom_call.1} parent=55 // loop_header
                %s248 = sphi 0, %s252
                %p249 = scmp.ge.s32.totalorder %s248, 1
                %s253 = sphi %s239, %s239
                %s254 = sphi %s237, %s237
              $region59: #{tpu_custom_call.1} parent=55 // loop_header_branch
                %251 = sbr.rel (%p249) target = $region63
              $region60: #{tpu_custom_call.1} parent=55 // loop_body
                %v255 = vld [vmem:[%s253] sm:$0xff]
                %256 = vst [vmem:[%s254] sm:$0xff] %v255
                %v257 = vld [vmem:[%s253 + $0x10] sm:$0xff]
                %258 = vst [vmem:[%s254 + $0x8] sm:$0xff] %v257
                %v259 = vld [vmem:[%s253 + $0x20] sm:$0xff]
                %260 = vst [vmem:[%s254 + $0x10] sm:$0xff] %v259
                %v261 = vld [vmem:[%s253 + $0x30] sm:$0xff]
                %262 = vst [vmem:[%s254 + $0x18] sm:$0xff] %v261
              $region61: #{tpu_custom_call.1} parent=55 // loop_footer
                %s252 = sadd.s32 1, %s248
              $region62: #{tpu_custom_call.1} parent=55 // loop_footer_branch
                %247 = sbr.rel target = $region58
              $region63: #{tpu_custom_call.1} parent=55 // loop_exit
                _
            $region56: #{tpu_custom_call.1} parent=47 // pred_fallthru
              _
          $region48: #{tpu_custom_call.1} parent=43 // pred_fallthru
            _
          %283 = vnop
        $region44: #{tpu_custom_call.1} parent=39 // pred_fallthru
          _
      $region40: #{tpu_custom_call.1} parent=5 // pred_fallthru
        _
      %p284 = scmp.le.s32.totalorder 1, %s16
      %p285 = scmp.lt.s32.totalorder %s16, 3
      %p286 = pnand %p284, %p285
      %p287 = pneg %p286
      // Predicated region
      $region79: #{tpu_custom_call.1} parent=5 // pred_check
        _
      $region80: #{tpu_custom_call.1} parent=5 // pred_check_branch
        %289 = sbr.rel (%p286) target = $region82
      $region81: #{tpu_custom_call.1} parent=5 // pred_region
        %s290 = ssub.s32 %s16, 1
        %s291 = sand.u32 %s29, 1
        %s292 = sand.u32 %s29, 1
        %s293 = smul.addr %s292, 32
        %s294 = scalar_lea.vmem [#allocation2], %s293
        // Predicated region
        $region83: #{tpu_custom_call.1} parent=81 // pred_check
          %p295 = pneg %p42
        $region84: #{tpu_custom_call.1} parent=81 // pred_check_branch
          %297 = sbr.rel (%p295) target = $region86
        $region85: #{tpu_custom_call.1} parent=81 // pred_region
          _
        $region86: #{tpu_custom_call.1} parent=81 // pred_fallthru
          _
        %s298 = sand.u32 %s29, 1
        %s299 = sand.u32 %s29, 1
        %s300 = smul.addr %s299, 32
        %s301 = scalar_lea.vmem [#allocation2], %s300
        %p302 = pneg %p42
        %p303 = pneg %p39
        %p304 = pneg %p63
        %p305 = pneg %p60
        %p306 = pneg %p84
        %p307 = pneg %p81
        %p308 = pneg %p105
        %p309 = pneg %p102
        %p310 = pneg %p126
        %p311 = pneg %p123
        %p312 = pneg %p147
        %p313 = pneg %p144
        %p314 = pneg %p168
        %p315 = pneg %p165
        %p316 = pneg %p194
        %p317 = pneg %p191
        %s318 = sand.u32 %s181, 1
        %s319 = scalar_lea.sflag [#allocation4], %s318
        %s320 = sand.u32 %s181, 1
        %s321 = smul.addr %s320, 32
        %s322 = scalar_lea.vmem [#allocation3], %s321
        %v324 = vld [vmem:[%s294] sm:$0xff]
        %v325 = vld [vmem:[%s294 + $0x8] sm:$0xff]
        %v326 = vld [vmem:[%s294 + $0x10] sm:$0xff]
        %v327 = vld [vmem:[%s294 + $0x18] sm:$0xff]
        %v328 = vpack.c.bf16 %v325, %v324
        %v329 = vpack.c.bf16 %v327, %v326
        %v330 = vld [vmem:[%s1] sm:$0xf]
        %v331 = vld [vmem:[%s1 + $0x4] sm:$0xf]
        %v332 = vld [vmem:[%s1 + $0x8] sm:$0xf]
        %v333 = vld [vmem:[%s1 + $0xc] sm:$0xf]
        %v334 = vld [vmem:[%s1 + $0x10] sm:$0xf]
        %v335 = vld [vmem:[%s1 + $0x14] sm:$0xf]
        %v336 = vld [vmem:[%s1 + $0x18] sm:$0xf]
        %v337 = vld [vmem:[%s1 + $0x1c] sm:$0xf]
        %v338 = vld [vmem:[%s2] sm:$0xff]
        %v339 = vld [vmem:[%s2 + $0x8] sm:$0xff]
        %v340 = vld [vmem:[%s2 + $0x10] sm:$0xff]
        %v341 = vld [vmem:[%s2 + $0x18] sm:$0xff]
        %v342 = vld [vmem:[%s2 + $0x20] sm:$0xff]
        %v343 = vld [vmem:[%s2 + $0x28] sm:$0xff]
        %v344 = vld [vmem:[%s2 + $0x30] sm:$0xff]
        %v345 = vld [vmem:[%s2 + $0x38] sm:$0xff]
        %347 = vset.pattern.permute.xlu0 0
        %348 = vperm.xlu0 %347, %v338
        %v349 = vpop.permute.xlu0 %348
        %352 = vset.pattern.permute.xlu0 0
        %353 = vperm.xlu0 %352, %v339
        %v354 = vpop.permute.xlu0 %353
        %357 = vset.pattern.permute.xlu0 0
        %358 = vperm.xlu0 %357, %v340
        %v359 = vpop.permute.xlu0 %358
        %362 = vset.pattern.permute.xlu0 0
        %363 = vperm.xlu0 %362, %v341
        %v364 = vpop.permute.xlu0 %363
        %367 = vset.pattern.permute.xlu0 0
        %368 = vperm.xlu0 %367, %v342
        %v369 = vpop.permute.xlu0 %368
        %372 = vset.pattern.permute.xlu0 0
        %373 = vperm.xlu0 %372, %v343
        %v374 = vpop.permute.xlu0 %373
        %377 = vset.pattern.permute.xlu0 0
        %378 = vperm.xlu0 %377, %v344
        %v379 = vpop.permute.xlu0 %378
        %382 = vset.pattern.permute.xlu0 0
        %383 = vperm.xlu0 %382, %v345
        %v384 = vpop.permute.xlu0 %383
        %v394 = vunpack.c.l.b16 %v330
        %v395 = vunpack.c.l.b16 %v331
        %v396 = vunpack.c.l.b16 %v332
        %v397 = vunpack.c.l.b16 %v333
        %v398 = vunpack.c.l.b16 %v334
        %v399 = vunpack.c.l.b16 %v335
        %v400 = vunpack.c.l.b16 %v336
        %v401 = vunpack.c.l.b16 %v337
        %v402 = vpack.c.b16 %v395, %v394
        %v403 = vpack.c.b16 %v397, %v396
        %v404 = vpack.c.b16 %v399, %v398
        %v405 = vpack.c.b16 %v401, %v400
        %vm406 = vcmask 261120
        %v408 = vsel %vm406, %v402, 0
        %v411 = vsel %vm406, %v403, 0
        %v414 = vsel %vm406, %v404, 0
        %v417 = vsel %vm406, %v405, 0
        %419 = vmatprep.subr.bf16.mxu0 0
        %420 = vmatpush1.bf16.msra.mxu0 %v328
        %421 = vmatprep.subr.bf16.mxu0 0
        %422 = vmatpush1.bf16.msra.mxu0 %v329
        %423 = vmatprep.subr.bf16.mxu0 0
        %424 = vmatpush1.bf16.msra.mxu0 0
        %425 = vmatprep.subr.bf16.mxu0 0
        %426 = vmatpush1.bf16.msra.mxu0 0
        %427 = vmatprep.subr.bf16.mxu0 0
        %428 = vmatpush1.bf16.msra.mxu0 0
        %429 = vmatprep.subr.bf16.mxu0 0
        %430 = vmatpush1.bf16.msra.mxu0 0
        %431 = vmatprep.subr.bf16.mxu0 0
        %432 = vmatpush1.bf16.msra.mxu0 0
        %433 = vmatprep.subr.bf16.mxu0 0
        %434 = vmatpush1.bf16.msra.mxu0 0
        %435 = vmatprep.subr.bf16.mxu0 0
        %436 = vmatpush1.bf16.msra.mxu0 0
        %437 = vmatprep.subr.bf16.mxu0 0
        %438 = vmatpush1.bf16.msra.mxu0 0
        %439 = vmatprep.subr.bf16.mxu0 0
        %440 = vmatpush1.bf16.msra.mxu0 0
        %441 = vmatprep.subr.bf16.mxu0 0
        %442 = vmatpush1.bf16.msra.mxu0 0
        %443 = vmatprep.subr.bf16.mxu0 0
        %444 = vmatpush1.bf16.msra.mxu0 0
        %445 = vmatprep.subr.bf16.mxu0 0
        %446 = vmatpush1.bf16.msra.mxu0 0
        %447 = vmatprep.subr.bf16.mxu0 0
        %448 = vmatpush1.bf16.msra.mxu0 0
        %449 = vmatprep.subr.bf16.mxu0 0
        %450 = vmatpush1.bf16.msra.mxu0 0
        %451 = vmatprep.mubr.bf16.mxu0 0
        %452 = vmatmul.mubr.bf16.gmra.mrb[0].mxu0 %v408
        %v453 = vpop.f32.mrb[0].mxu0
        %v454 = vadd.f32 %v349, %v453
        %v455 = vpop.f32.mrb[0].mxu0
        %v456 = vpop.f32.mrb[0].mxu0
        %v457 = vadd.f32 %v354, %v456
        %v458 = vpop.f32.mrb[0].mxu0
        %459 = vmatprep.mubr.bf16.mxu0 0
        %460 = vmatmul.mubr.bf16.gmra.mrb[0].mxu0 %v411
        %v461 = vpop.f32.mrb[0].mxu0
        %v462 = vadd.f32 %v359, %v461
        %v463 = vpop.f32.mrb[0].mxu0
        %v464 = vpop.f32.mrb[0].mxu0
        %v465 = vadd.f32 %v364, %v464
        %v466 = vpop.f32.mrb[0].mxu0
        %467 = vmatprep.mubr.bf16.mxu0 0
        %468 = vmatmul.mubr.bf16.gmra.mrb[0].mxu0 %v414
        %v469 = vpop.f32.mrb[0].mxu0
        %v470 = vadd.f32 %v369, %v469
        %v471 = vpop.f32.mrb[0].mxu0
        %v472 = vpop.f32.mrb[0].mxu0
        %v473 = vadd.f32 %v374, %v472
        %v474 = vpop.f32.mrb[0].mxu0
        %475 = vmatprep.mubr.bf16.mxu0 0
        %476 = vmatmul.mubr.bf16.gmra.mrb[0].mxu0 %v417
        %v477 = vpop.f32.mrb[0].mxu0
        %v478 = vadd.f32 %v379, %v477
        %v479 = vpop.f32.mrb[0].mxu0
        %v480 = vpop.f32.mrb[0].mxu0
        %v481 = vadd.f32 %v384, %v480
        %v482 = vpop.f32.mrb[0].mxu0
        %483 = vdwg.mxu0
        %v484 = vmax.f32 %v454, 0.0
        %v485 = vmax.f32 %v457, 0.0
        %v486 = vmax.f32 %v462, 0.0
        %v487 = vmax.f32 %v465, 0.0
        %v488 = vmax.f32 %v470, 0.0
        %v489 = vmax.f32 %v473, 0.0
        %v490 = vmax.f32 %v478, 0.0
        %v491 = vmax.f32 %v481, 0.0
        %v492 = vld [vmem:[%s3] sm:$0xf]
        %v493 = vld [vmem:[%s3 + $0x4] sm:$0xf]
        %v494 = vld [vmem:[%s3 + $0x8] sm:$0xf]
        %v495 = vld [vmem:[%s3 + $0xc] sm:$0xf]
        %v496 = vld [vmem:[%s3 + $0x10] sm:$0xf]
        %v497 = vld [vmem:[%s3 + $0x14] sm:$0xf]
        %v498 = vld [vmem:[%s3 + $0x18] sm:$0xf]
        %v499 = vld [vmem:[%s3 + $0x1c] sm:$0xf]
        %v500 = vpack.c.bf16 %v485, %v484
        %v501 = vpack.c.bf16 %v487, %v486
        %v502 = vpack.c.bf16 %v489, %v488
        %v503 = vpack.c.bf16 %v491, %v490
        %v504 = vld [vmem:[%s4] sm:$0xff]
        %v505 = vld [vmem:[%s4 + $0x8] sm:$0xff]
        %v506 = vld [vmem:[%s4 + $0x10] sm:$0xff]
        %v507 = vld [vmem:[%s4 + $0x18] sm:$0xff]
        %v508 = vld [vmem:[%s4 + $0x20] sm:$0xff]
        %v509 = vld [vmem:[%s4 + $0x28] sm:$0xff]
        %v510 = vld [vmem:[%s4 + $0x30] sm:$0xff]
        %v511 = vld [vmem:[%s4 + $0x38] sm:$0xff]
        %513 = vset.pattern.permute.xlu0 0
        %514 = vperm.xlu0 %513, %v504
        %v515 = vpop.permute.xlu0 %514
        %518 = vset.pattern.permute.xlu0 0
        %519 = vperm.xlu0 %518, %v505
        %v520 = vpop.permute.xlu0 %519
        %523 = vset.pattern.permute.xlu0 0
        %524 = vperm.xlu0 %523, %v506
        %v525 = vpop.permute.xlu0 %524
        %528 = vset.pattern.permute.xlu0 0
        %529 = vperm.xlu0 %528, %v507
        %v530 = vpop.permute.xlu0 %529
        %533 = vset.pattern.permute.xlu0 0
        %534 = vperm.xlu0 %533, %v508
        %v535 = vpop.permute.xlu0 %534
        %538 = vset.pattern.permute.xlu0 0
        %539 = vperm.xlu0 %538, %v509
        %v540 = vpop.permute.xlu0 %539
        %543 = vset.pattern.permute.xlu0 0
        %544 = vperm.xlu0 %543, %v510
        %v545 = vpop.permute.xlu0 %544
        %548 = vset.pattern.permute.xlu0 0
        %549 = vperm.xlu0 %548, %v511
        %v550 = vpop.permute.xlu0 %549
        %v560 = vunpack.c.l.b16 %v492
        %v561 = vunpack.c.l.b16 %v493
        %v562 = vunpack.c.l.b16 %v494
        %v563 = vunpack.c.l.b16 %v495
        %v564 = vunpack.c.l.b16 %v496
        %v565 = vunpack.c.l.b16 %v497
        %v566 = vunpack.c.l.b16 %v498
        %v567 = vunpack.c.l.b16 %v499
        %v568 = vpack.c.b16 %v561, %v560
        %v569 = vpack.c.b16 %v563, %v562
        %v570 = vpack.c.b16 %v565, %v564
        %v571 = vpack.c.b16 %v567, %v566
        %vm572 = vcmask 523264
        %v574 = vsel %vm572, %v568, 0
        %v577 = vsel %vm572, %v569, 0
        %v580 = vsel %vm572, %v570, 0
        %v583 = vsel %vm572, %v571, 0
        %585 = vmatprep.subr.bf16.mxu0 0
        %586 = vmatpush1.bf16.msra.mxu0 %v500
        %587 = vmatprep.subr.bf16.mxu0 0
        %588 = vmatpush1.bf16.msra.mxu0 %v501
        %589 = vmatprep.subr.bf16.mxu0 0
        %590 = vmatpush1.bf16.msra.mxu0 %v502
        %591 = vmatprep.subr.bf16.mxu0 0
        %592 = vmatpush1.bf16.msra.mxu0 %v503
        %593 = vmatprep.subr.bf16.mxu0 0
        %594 = vmatpush1.bf16.msra.mxu0 0
        %595 = vmatprep.subr.bf16.mxu0 0
        %596 = vmatpush1.bf16.msra.mxu0 0
        %597 = vmatprep.subr.bf16.mxu0 0
        %598 = vmatpush1.bf16.msra.mxu0 0
        %599 = vmatprep.subr.bf16.mxu0 0
        %600 = vmatpush1.bf16.msra.mxu0 0
        %601 = vmatprep.subr.bf16.mxu0 0
        %602 = vmatpush1.bf16.msra.mxu0 0
        %603 = vmatprep.subr.bf16.mxu0 0
        %604 = vmatpush1.bf16.msra.mxu0 0
        %605 = vmatprep.subr.bf16.mxu0 0
        %606 = vmatpush1.bf16.msra.mxu0 0
        %607 = vmatprep.subr.bf16.mxu0 0
        %608 = vmatpush1.bf16.msra.mxu0 0
        %609 = vmatprep.subr.bf16.mxu0 0
        %610 = vmatpush1.bf16.msra.mxu0 0
        %611 = vmatprep.subr.bf16.mxu0 0
        %612 = vmatpush1.bf16.msra.mxu0 0
        %613 = vmatprep.subr.bf16.mxu0 0
        %614 = vmatpush1.bf16.msra.mxu0 0
        %615 = vmatprep.subr.bf16.mxu0 0
        %616 = vmatpush1.bf16.msra.mxu0 0
        %617 = vmatprep.mubr.bf16.mxu0 0
        %618 = vmatmul.mubr.bf16.gmra.mrb[0].mxu0 %v574
        %v619 = vpop.f32.mrb[0].mxu0
        %v620 = vadd.f32 %v515, %v619
        %v621 = vpop.f32.mrb[0].mxu0
        %v622 = vpop.f32.mrb[0].mxu0
        %v623 = vadd.f32 %v520, %v622
        %v624 = vpop.f32.mrb[0].mxu0
        %625 = vmatprep.mubr.bf16.mxu0 0
        %626 = vmatmul.mubr.bf16.gmra.mrb[0].mxu0 %v577
        %v627 = vpop.f32.mrb[0].mxu0
        %v628 = vadd.f32 %v525, %v627
        %v629 = vpop.f32.mrb[0].mxu0
        %v630 = vpop.f32.mrb[0].mxu0
        %v631 = vadd.f32 %v530, %v630
        %v632 = vpop.f32.mrb[0].mxu0
        %633 = vmatprep.mubr.bf16.mxu0 0
        %634 = vmatmul.mubr.bf16.gmra.mrb[0].mxu0 %v580
        %v635 = vpop.f32.mrb[0].mxu0
        %v636 = vadd.f32 %v535, %v635
        %v637 = vpop.f32.mrb[0].mxu0
        %v638 = vpop.f32.mrb[0].mxu0
        %v639 = vadd.f32 %v540, %v638
        %v640 = vpop.f32.mrb[0].mxu0
        %641 = vmatprep.mubr.bf16.mxu0 0
        %642 = vmatmul.mubr.bf16.gmra.mrb[0].mxu0 %v583
        %v643 = vpop.f32.mrb[0].mxu0
        %v644 = vadd.f32 %v545, %v643
        %v645 = vpop.f32.mrb[0].mxu0
        %v646 = vpop.f32.mrb[0].mxu0
        %v647 = vadd.f32 %v550, %v646
        %v648 = vpop.f32.mrb[0].mxu0
        %649 = vdwg.mxu0
        %v650 = vadd.f32 %v484, %v620
        %v651 = vadd.f32 %v485, %v623
        %v652 = vadd.f32 %v486, %v628
        %v653 = vadd.f32 %v487, %v631
        %v654 = vadd.f32 %v488, %v636
        %v655 = vadd.f32 %v489, %v639
        %v656 = vadd.f32 %v490, %v644
        %v657 = vadd.f32 %v491, %v647
        %v658 = vmax.f32 %v650, 0.0
        %v659 = vmax.f32 %v651, 0.0
        %v660 = vmax.f32 %v652, 0.0
        %v661 = vmax.f32 %v653, 0.0
        %v662 = vmax.f32 %v654, 0.0
        %v663 = vmax.f32 %v655, 0.0
        %v664 = vmax.f32 %v656, 0.0
        %v665 = vmax.f32 %v657, 0.0
        %v666 = vadd.f32 %v650, %v658
        %v667 = vadd.f32 %v651, %v659
        %v668 = vadd.f32 %v652, %v660
        %v669 = vadd.f32 %v653, %v661
        %v670 = vadd.f32 %v654, %v662
        %v671 = vadd.f32 %v655, %v663
        %v672 = vadd.f32 %v656, %v664
        %v673 = vadd.f32 %v657, %v665
        %s674 = scalar_lea.vmem %s3, 32
        %v675 = vld [vmem:[%s674] sm:$0xf]
        %v676 = vld [vmem:[%s674 + $0x4] sm:$0xf]
        %v677 = vld [vmem:[%s674 + $0x8] sm:$0xf]
        %v678 = vld [vmem:[%s674 + $0xc] sm:$0xf]
        %v679 = vld [vmem:[%s674 + $0x10] sm:$0xf]
        %v680 = vld [vmem:[%s674 + $0x14] sm:$0xf]
        %v681 = vld [vmem:[%s674 + $0x18] sm:$0xf]
        %v682 = vld [vmem:[%s674 + $0x1c] sm:$0xf]
        %v683 = vpack.c.bf16 %v667, %v666
        %v684 = vpack.c.bf16 %v669, %v668
        %v685 = vpack.c.bf16 %v671, %v670
        %v686 = vpack.c.bf16 %v673, %v672
        %s687 = scalar_lea.vmem %s4, 64
        %v688 = vld [vmem:[%s687] sm:$0xff]
        %v689 = vld [vmem:[%s687 + $0x8] sm:$0xff]
        %v690 = vld [vmem:[%s687 + $0x10] sm:$0xff]
        %v691 = vld [vmem:[%s687 + $0x18] sm:$0xff]
        %v692 = vld [vmem:[%s687 + $0x20] sm:$0xff]
        %v693 = vld [vmem:[%s687 + $0x28] sm:$0xff]
        %v694 = vld [vmem:[%s687 + $0x30] sm:$0xff]
        %v695 = vld [vmem:[%s687 + $0x38] sm:$0xff]
        %697 = vset.pattern.permute.xlu0 0
        %698 = vperm.xlu0 %697, %v688
        %v699 = vpop.permute.xlu0 %698
        %702 = vset.pattern.permute.xlu0 0
        %703 = vperm.xlu0 %702, %v689
        %v704 = vpop.permute.xlu0 %703
        %707 = vset.pattern.permute.xlu0 0
        %708 = vperm.xlu0 %707, %v690
        %v709 = vpop.permute.xlu0 %708
        %712 = vset.pattern.permute.xlu0 0
        %713 = vperm.xlu0 %712, %v691
        %v714 = vpop.permute.xlu0 %713
        %717 = vset.pattern.permute.xlu0 0
        %718 = vperm.xlu0 %717, %v692
        %v719 = vpop.permute.xlu0 %718
        %722 = vset.pattern.permute.xlu0 0
        %723 = vperm.xlu0 %722, %v693
        %v724 = vpop.permute.xlu0 %723
        %727 = vset.pattern.permute.xlu0 0
        %728 = vperm.xlu0 %727, %v694
        %v729 = vpop.permute.xlu0 %728
        %732 = vset.pattern.permute.xlu0 0
        %733 = vperm.xlu0 %732, %v695
        %v734 = vpop.permute.xlu0 %733
        %v744 = vunpack.c.l.b16 %v675
        %v745 = vunpack.c.l.b16 %v676
        %v746 = vunpack.c.l.b16 %v677
        %v747 = vunpack.c.l.b16 %v678
        %v748 = vunpack.c.l.b16 %v679
        %v749 = vunpack.c.l.b16 %v680
        %v750 = vunpack.c.l.b16 %v681
        %v751 = vunpack.c.l.b16 %v682
        %v752 = vpack.c.b16 %v745, %v744
        %v753 = vpack.c.b16 %v747, %v746
        %v754 = vpack.c.b16 %v749, %v748
        %v755 = vpack.c.b16 %v751, %v750
        %v757 = vsel %vm572, %v752, 0
        %v760 = vsel %vm572, %v753, 0
        %v763 = vsel %vm572, %v754, 0
        %v766 = vsel %vm572, %v755, 0
        %768 = vmatprep.subr.bf16.mxu0 0
        %769 = vmatpush1.bf16.msra.mxu0 %v683
        %770 = vmatprep.subr.bf16.mxu0 0
        %771 = vmatpush1.bf16.msra.mxu0 %v684
        %772 = vmatprep.subr.bf16.mxu0 0
        %773 = vmatpush1.bf16.msra.mxu0 %v685
        %774 = vmatprep.subr.bf16.mxu0 0
        %775 = vmatpush1.bf16.msra.mxu0 %v686
        %776 = vmatprep.subr.bf16.mxu0 0
        %777 = vmatpush1.bf16.msra.mxu0 0
        %778 = vmatprep.subr.bf16.mxu0 0
        %779 = vmatpush1.bf16.msra.mxu0 0
        %780 = vmatprep.subr.bf16.mxu0 0
        %781 = vmatpush1.bf16.msra.mxu0 0
        %782 = vmatprep.subr.bf16.mxu0 0
        %783 = vmatpush1.bf16.msra.mxu0 0
        %784 = vmatprep.subr.bf16.mxu0 0
        %785 = vmatpush1.bf16.msra.mxu0 0
        %786 = vmatprep.subr.bf16.mxu0 0
        %787 = vmatpush1.bf16.msra.mxu0 0
        %788 = vmatprep.subr.bf16.mxu0 0
        %789 = vmatpush1.bf16.msra.mxu0 0
        %790 = vmatprep.subr.bf16.mxu0 0
        %791 = vmatpush1.bf16.msra.mxu0 0
        %792 = vmatprep.subr.bf16.mxu0 0
        %793 = vmatpush1.bf16.msra.mxu0 0
        %794 = vmatprep.subr.bf16.mxu0 0
        %795 = vmatpush1.bf16.msra.mxu0 0
        %796 = vmatprep.subr.bf16.mxu0 0
        %797 = vmatpush1.bf16.msra.mxu0 0
        %798 = vmatprep.subr.bf16.mxu0 0
        %799 = vmatpush1.bf16.msra.mxu0 0
        %800 = vmatprep.mubr.bf16.mxu0 0
        %801 = vmatmul.mubr.bf16.gmra.mrb[0].mxu0 %v757
        %v802 = vpop.f32.mrb[0].mxu0
        %v803 = vadd.f32 %v699, %v802
        %v804 = vpop.f32.mrb[0].mxu0
        %v805 = vpop.f32.mrb[0].mxu0
        %v806 = vadd.f32 %v704, %v805
        %v807 = vpop.f32.mrb[0].mxu0
        %808 = vmatprep.mubr.bf16.mxu0 0
        %809 = vmatmul.mubr.bf16.gmra.mrb[0].mxu0 %v760
        %v810 = vpop.f32.mrb[0].mxu0
        %v811 = vadd.f32 %v709, %v810
        %v812 = vpop.f32.mrb[0].mxu0
        %v813 = vpop.f32.mrb[0].mxu0
        %v814 = vadd.f32 %v714, %v813
        %v815 = vpop.f32.mrb[0].mxu0
        %816 = vmatprep.mubr.bf16.mxu0 0
        %817 = vmatmul.mubr.bf16.gmra.mrb[0].mxu0 %v763
        %v818 = vpop.f32.mrb[0].mxu0
        %v819 = vadd.f32 %v719, %v818
        %v820 = vpop.f32.mrb[0].mxu0
        %v821 = vpop.f32.mrb[0].mxu0
        %v822 = vadd.f32 %v724, %v821
        %v823 = vpop.f32.mrb[0].mxu0
        %824 = vmatprep.mubr.bf16.mxu0 0
        %825 = vmatmul.mubr.bf16.gmra.mrb[0].mxu0 %v766
        %v826 = vpop.f32.mrb[0].mxu0
        %v827 = vadd.f32 %v729, %v826
        %v828 = vpop.f32.mrb[0].mxu0
        %v829 = vpop.f32.mrb[0].mxu0
        %v830 = vadd.f32 %v734, %v829
        %v831 = vpop.f32.mrb[0].mxu0
        %832 = vdwg.mxu0
        %v833 = vadd.f32 %v666, %v803
        %v834 = vadd.f32 %v667, %v806
        %v835 = vadd.f32 %v668, %v811
        %v836 = vadd.f32 %v669, %v814
        %v837 = vadd.f32 %v670, %v819
        %v838 = vadd.f32 %v671, %v822
        %v839 = vadd.f32 %v672, %v827
        %v840 = vadd.f32 %v673, %v830
        %v841 = vmax.f32 %v833, 0.0
        %v842 = vmax.f32 %v834, 0.0
        %v843 = vmax.f32 %v835, 0.0
        %v844 = vmax.f32 %v836, 0.0
        %v845 = vmax.f32 %v837, 0.0
        %v846 = vmax.f32 %v838, 0.0
        %v847 = vmax.f32 %v839, 0.0
        %v848 = vmax.f32 %v840, 0.0
        %v849 = vadd.f32 %v833, %v841
        %v850 = vadd.f32 %v834, %v842
        %v851 = vadd.f32 %v835, %v843
        %v852 = vadd.f32 %v836, %v844
        %v853 = vadd.f32 %v837, %v845
        %v854 = vadd.f32 %v838, %v846
        %v855 = vadd.f32 %v839, %v847
        %v856 = vadd.f32 %v840, %v848
        %v857 = vld [vmem:[%s5] sm:$0xf]
        %v858 = vld [vmem:[%s5 + $0x4] sm:$0xf]
        %v859 = vld [vmem:[%s5 + $0x8] sm:$0xf]
        %v860 = vld [vmem:[%s5 + $0xc] sm:$0xf]
        %v861 = vpack.c.bf16 %v850, %v849
        %v862 = vpack.c.bf16 %v852, %v851
        %v863 = vpack.c.bf16 %v854, %v853
        %v864 = vpack.c.bf16 %v856, %v855
        %v865 = vld [vmem:[%s6] sm:$0xff]
        %v866 = vld [vmem:[%s6 + $0x8] sm:$0xff]
        %v867 = vld [vmem:[%s6 + $0x10] sm:$0xff]
        %v868 = vld [vmem:[%s6 + $0x18] sm:$0xff]
        %870 = vset.pattern.permute.xlu0 0
        %871 = vperm.xlu0 %870, %v865
        %v872 = vpop.permute.xlu0 %871
        %875 = vset.pattern.permute.xlu0 0
        %876 = vperm.xlu0 %875, %v866
        %v877 = vpop.permute.xlu0 %876
        %880 = vset.pattern.permute.xlu0 0
        %881 = vperm.xlu0 %880, %v867
        %v882 = vpop.permute.xlu0 %881
        %885 = vset.pattern.permute.xlu0 0
        %886 = vperm.xlu0 %885, %v868
        %v887 = vpop.permute.xlu0 %886
        %v893 = vunpack.c.l.b16 %v857
        %v894 = vunpack.c.l.b16 %v858
        %v895 = vunpack.c.l.b16 %v859
        %v896 = vunpack.c.l.b16 %v860
        %v897 = vpack.c.b16 %v894, %v893
        %v898 = vpack.c.b16 %v896, %v895
        %v900 = vsel %vm572, %v897, 0
        %v903 = vsel %vm572, %v898, 0
        %905 = vmatprep.subr.bf16.mxu0 0
        %906 = vmatpush1.bf16.msra.mxu0 %v861
        %907 = vmatprep.subr.bf16.mxu0 0
        %908 = vmatpush1.bf16.msra.mxu0 %v862
        %909 = vmatprep.subr.bf16.mxu0 0
        %910 = vmatpush1.bf16.msra.mxu0 %v863
        %911 = vmatprep.subr.bf16.mxu0 0
        %912 = vmatpush1.bf16.msra.mxu0 %v864
        %913 = vmatprep.subr.bf16.mxu0 0
        %914 = vmatpush1.bf16.msra.mxu0 0
        %915 = vmatprep.subr.bf16.mxu0 0
        %916 = vmatpush1.bf16.msra.mxu0 0
        %917 = vmatprep.subr.bf16.mxu0 0
        %918 = vmatpush1.bf16.msra.mxu0 0
        %919 = vmatprep.subr.bf16.mxu0 0
        %920 = vmatpush1.bf16.msra.mxu0 0
        %921 = vmatprep.subr.bf16.mxu0 0
        %922 = vmatpush1.bf16.msra.mxu0 0
        %923 = vmatprep.subr.bf16.mxu0 0
        %924 = vmatpush1.bf16.msra.mxu0 0
        %925 = vmatprep.subr.bf16.mxu0 0
        %926 = vmatpush1.bf16.msra.mxu0 0
        %927 = vmatprep.subr.bf16.mxu0 0
        %928 = vmatpush1.bf16.msra.mxu0 0
        %929 = vmatprep.subr.bf16.mxu0 0
        %930 = vmatpush1.bf16.msra.mxu0 0
        %931 = vmatprep.subr.bf16.mxu0 0
        %932 = vmatpush1.bf16.msra.mxu0 0
        %933 = vmatprep.subr.bf16.mxu0 0
        %934 = vmatpush1.bf16.msra.mxu0 0
        %935 = vmatprep.subr.bf16.mxu0 0
        %936 = vmatpush1.bf16.msra.mxu0 0
        %937 = vmatprep.mubr.bf16.mxu0 0
        %938 = vmatmul.mubr.bf16.gmra.mrb[0].mxu0 %v900
        %v939 = vpop.f32.mrb[0].mxu0
        %v940 = vadd.f32 %v872, %v939
        %v941 = vpop.f32.mrb[0].mxu0
        %v942 = vpop.f32.mrb[0].mxu0
        %v943 = vadd.f32 %v877, %v942
        %v944 = vpop.f32.mrb[0].mxu0
        %945 = vmatprep.mubr.bf16.mxu0 0
        %946 = vmatmul.mubr.bf16.gmra.mrb[0].mxu0 %v903
        %v947 = vpop.f32.mrb[0].mxu0
        %v948 = vadd.f32 %v882, %v947
        %v949 = vpop.f32.mrb[0].mxu0
        %v950 = vpop.f32.mrb[0].mxu0
        %v951 = vadd.f32 %v887, %v950
        %v952 = vpop.f32.mrb[0].mxu0
        %953 = vdwg.mxu0
        %v954 = vadd.f32 %v324, %v940
        %v955 = vadd.f32 %v325, %v943
        %v956 = vadd.f32 %v326, %v948
        %v957 = vadd.f32 %v327, %v951
        %v958 = vmul.f32 %v954, 0.5
        %v959 = vmul.f32 %v955, 0.5
        %v960 = vmul.f32 %v956, 0.5
        %v961 = vmul.f32 %v957, 0.5
        %962 = vst [vmem:[%s322] sm:$0xff] %v958
        %963 = vst [vmem:[%s322 + $0x8] sm:$0xff] %v959
        %964 = vst [vmem:[%s322 + $0x10] sm:$0xff] %v960
        %965 = vst [vmem:[%s322 + $0x18] sm:$0xff] %v961
        %s966 = sand.u32 %s181, 1
        %s967 = scalar_lea.sflag [#allocation4], %s966
        %s968 = sand.u32 %s181, 1
        %s969 = smul.addr %s968, 32
        %s970 = scalar_lea.vmem [#allocation3], %s969
        // Predicated region
        $region87: #{tpu_custom_call.1} parent=81 // pred_check
          %p971 = pneg %p191
        $region88: #{tpu_custom_call.1} parent=81 // pred_check_branch
          %973 = sbr.rel (%p971) target = $region90
        $region89: #{tpu_custom_call.1} parent=81 // pred_region
          %s975 = ssub.s32 512, 512
          %976 = vsyncadd %s967, %s975
          %s977 = smul.addr %s21, 128
          %s978 = scalar_lea.hbm %s7, %s977
          %s979 = sshll.u32 %s970, 4
          %s980 = int_to_ptr.vmem [resolvable:$true] %s979
          %985 = dma.vmem_to_hbm [thread:$0]  %s980, 512, %s978, %s967, 128, 256, 8
        $region90: #{tpu_custom_call.1} parent=81 // pred_fallthru
          _
      $region82: #{tpu_custom_call.1} parent=5 // pred_fallthru
        _
      %p986 = scmp.le.s32.totalorder 2, %s16
      // Predicated region
      $region91: #{tpu_custom_call.1} parent=5 // pred_check
        %p987 = pneg %p986
      $region92: #{tpu_custom_call.1} parent=5 // pred_check_branch
        %989 = sbr.rel (%p987) target = $region94
      $region93: #{tpu_custom_call.1} parent=5 // pred_region
        %s990 = ssub.s32 %s16, 2
        // Predicated region
        $region95: #{tpu_custom_call.1} parent=93 // pred_check
          %p991 = pneg %p197
        $region96: #{tpu_custom_call.1} parent=93 // pred_check_branch
          %993 = sbr.rel (%p991) target = $region98
        $region97: #{tpu_custom_call.1} parent=93 // pred_region
          %s994 = sand.u32 %s182, 1
          %s995 = scalar_lea.sflag [#allocation4], %s994
          %s996 = sand.u32 %s182, 1
          %s997 = smul.addr %s996, 32
          %s998 = scalar_lea.vmem [#allocation3], %s997
          %999 = dma.done %s995, 512
        $region98: #{tpu_custom_call.1} parent=93 // pred_fallthru
          _
      $region94: #{tpu_custom_call.1} parent=5 // pred_fallthru
        _
    $region6: #{tpu_custom_call.1} parent=1 // loop_footer
      %s20 = sadd.s32 1, %s16
    $region7: #{tpu_custom_call.1} parent=1 // loop_footer_branch
      %15 = sbr.rel target = $region3
    $region8: #{tpu_custom_call.1} parent=1 // loop_exit
      _
    %1000 = vsyncpa [#allocation4], 1
    %s1001 = scalar_lea.sflag [#allocation4], 1
    %1002 = vsyncpa %s1001, 1

// kernel: tpu_custom_call.1
$region0: #{tpu_custom_call.1}
  #allocation0 [shape = 'u32[]', space=smem, size = 0x4, offset = 0x4, fixed_abs, tag = 'smem constant byte address 0x4 - core index']
  #allocation1 [shape = 'u32[144,128]{1,0:T(1,128)}', space=vmem, size = 0x12000, scoped, tag = 'internal scratch']
  %s0 = inlined_call_operand.vmem [shape: f32[32,256], index: 0, kind: input, shape index: {}]
  %s1 = inlined_call_operand.vmem [shape: bf16[64,32], index: 1, kind: input, shape index: {}]
  %s2 = inlined_call_operand.vmem [shape: f32[64,1], index: 2, kind: input, shape index: {}]
  %s3 = inlined_call_operand.vmem [shape: bf16[2,64,64], index: 3, kind: input, shape index: {}]
  %s4 = inlined_call_operand.vmem [shape: f32[2,64,1], index: 4, kind: input, shape index: {}]
  %s5 = inlined_call_operand.vmem [shape: bf16[32,64], index: 5, kind: input, shape index: {}]
  %s6 = inlined_call_operand.vmem [shape: f32[32,1], index: 6, kind: input, shape index: {}]
  %s7 = inlined_call_operand.hbm [shape: f32[32,256], index: 7, kind: output, shape index: {}]
  %s8 = sld [smem:[#allocation0]]
  $region99: #{tpu_custom_call.1} parent=0
    _
  %s10 = ssub.s32 1, %s8
  %s11 = scalar_select 0, %s10, %s8
  $region1: #{tpu_custom_call.1} parent=0
    #allocation2 [shape = 'u8[32768]{0}', space=vmem, size = 0x8000, scoped, tag = 'input window, operand 0']
    #allocation3 [shape = 'u8[32768]{0}', space=vmem, size = 0x8000, scoped, tag = 'output window, operand 0']
    #allocation4 [shape = 's32[2]{0}', space=sflag, size = 0x8, scoped, tag = 'scoped memory for tpu_custom_call.1']
    %12 = vsyncpa [#allocation4], 0
    %s13 = scalar_lea.sflag [#allocation4], 1
    %14 = vsyncpa %s13, 0
    loop: start=0, step=1, limit=4
    $region2: #{tpu_custom_call.1} parent=1 // loop_pre_header
      _
    $region3: #{tpu_custom_call.1} parent=1 // loop_header
      %s16 = sphi 0, %s20
      %p17 = scmp.ge.s32.totalorder %s16, 4
      %s26 = sphi 0, %s28
      %s29 = sphi 0, %s26
      %s30 = sphi 0, %s29
      %s46 = sphi 0, %s30
      %s50 = sphi 0, %s50
      %s52 = sphi 0, %s50
      %s53 = sphi 0, %s52
      %s67 = sphi 0, %s53
      %s71 = sphi 0, %s71
      %s73 = sphi 0, %s71
      %s74 = sphi 0, %s73
      %s88 = sphi 0, %s74
      %s92 = sphi 0, %s92
      %s94 = sphi 0, %s92
      %s95 = sphi 0, %s94
      %s109 = sphi 0, %s95
      %s113 = sphi 0, %s113
      %s115 = sphi 0, %s113
      %s116 = sphi 0, %s115
      %s130 = sphi 0, %s116
      %s134 = sphi 0, %s134
      %s136 = sphi 0, %s134
      %s137 = sphi 0, %s136
      %s151 = sphi 0, %s137
      %s155 = sphi 0, %s155
      %s157 = sphi 0, %s155
      %s158 = sphi 0, %s157
      %s172 = sphi 0, %s158
      %s178 = sphi 0, %s180
      %s181 = sphi 0, %s178
      %s182 = sphi 0, %s181
      %s198 = sphi 0, %s182
    $region4: #{tpu_custom_call.1} parent=1 // loop_header_branch
      %19 = sbr.rel (%p17) target = $region8
    $region5: #{tpu_custom_call.1} parent=1 // loop_body
      %s21 = ssub.s32 %s16, 1
      %s22 = ssub.s32 %s16, 2
      %s23 = sadd.s32 %s16, 1
      %s24 = ssub.s32 %s16, %s23
      %p25 = scmp.eq.s32.totalorder %s24, 0
      %s27 = sadd.s32 %s26, 1
      %s28 = scalar_select %p25, %s26, %s27
      %p31 = pneg %p25
      %p32 = scmp.eq.s32.totalorder %s16, 1
      %p33 = por %p31, %p32
      %p34 = scmp.ne.s32.totalorder %s26, %s29
      %p35 = scmp.eq.s32.totalorder %s16, 0
      %p36 = por %p34, %p35
      %p37 = scmp.ne.s32.totalorder %s26, %s29
      %p38 = scmp.eq.s32.totalorder %s21, 1
      %p39 = por %p37, %p38
      %p40 = scmp.ne.s32.totalorder %s29, %s30
      %p41 = scmp.eq.s32.totalorder %s21, 0
      %p42 = por %p40, %p41
      %p43 = scmp.ne.s32.totalorder %s29, %s30
      %p44 = scmp.eq.s32.totalorder %s22, 1
      %p45 = por %p43, %p44
      %p47 = scmp.ne.s32.totalorder %s30, %s46
      %p48 = scmp.eq.s32.totalorder %s22, 0
      %p49 = por %p47, %p48
      %s51 = sadd.s32 %s50, 1
      %p54 = scmp.eq.s32.totalorder %s16, 1
      %p55 = scmp.ne.s32.totalorder %s50, %s52
      %p56 = scmp.eq.s32.totalorder %s16, 0
      %p57 = por %p55, %p56
      %p58 = scmp.ne.s32.totalorder %s50, %s52
      %p59 = scmp.eq.s32.totalorder %s21, 1
      %p60 = por %p58, %p59
      %p61 = scmp.ne.s32.totalorder %s52, %s53
      %p62 = scmp.eq.s32.totalorder %s21, 0
      %p63 = por %p61, %p62
      %p64 = scmp.ne.s32.totalorder %s52, %s53
      %p65 = scmp.eq.s32.totalorder %s22, 1
      %p66 = por %p64, %p65
      %p68 = scmp.ne.s32.totalorder %s53, %s67
      %p69 = scmp.eq.s32.totalorder %s22, 0
      %p70 = por %p68, %p69
      %s72 = sadd.s32 %s71, 1
      %p75 = scmp.eq.s32.totalorder %s16, 1
      %p76 = scmp.ne.s32.totalorder %s71, %s73
      %p77 = scmp.eq.s32.totalorder %s16, 0
      %p78 = por %p76, %p77
      %p79 = scmp.ne.s32.totalorder %s71, %s73
      %p80 = scmp.eq.s32.totalorder %s21, 1
      %p81 = por %p79, %p80
      %p82 = scmp.ne.s32.totalorder %s73, %s74
      %p83 = scmp.eq.s32.totalorder %s21, 0
      %p84 = por %p82, %p83
      %p85 = scmp.ne.s32.totalorder %s73, %s74
      %p86 = scmp.eq.s32.totalorder %s22, 1
      %p87 = por %p85, %p86
      %p89 = scmp.ne.s32.totalorder %s74, %s88
      %p90 = scmp.eq.s32.totalorder %s22, 0
      %p91 = por %p89, %p90
      %s93 = sadd.s32 %s92, 1
      %p96 = scmp.eq.s32.totalorder %s16, 1
      %p97 = scmp.ne.s32.totalorder %s92, %s94
      %p98 = scmp.eq.s32.totalorder %s16, 0
      %p99 = por %p97, %p98
      %p100 = scmp.ne.s32.totalorder %s92, %s94
      %p101 = scmp.eq.s32.totalorder %s21, 1
      %p102 = por %p100, %p101
      %p103 = scmp.ne.s32.totalorder %s94, %s95
      %p104 = scmp.eq.s32.totalorder %s21, 0
      %p105 = por %p103, %p104
      %p106 = scmp.ne.s32.totalorder %s94, %s95
      %p107 = scmp.eq.s32.totalorder %s22, 1
      %p108 = por %p106, %p107
      %p110 = scmp.ne.s32.totalorder %s95, %s109
      %p111 = scmp.eq.s32.totalorder %s22, 0
      %p112 = por %p110, %p111
      %s114 = sadd.s32 %s113, 1
      %p117 = scmp.eq.s32.totalorder %s16, 1
      %p118 = scmp.ne.s32.totalorder %s113, %s115
      %p119 = scmp.eq.s32.totalorder %s16, 0
      %p120 = por %p118, %p119
      %p121 = scmp.ne.s32.totalorder %s113, %s115
      %p122 = scmp.eq.s32.totalorder %s21, 1
      %p123 = por %p121, %p122
      %p124 = scmp.ne.s32.totalorder %s115, %s116
      %p125 = scmp.eq.s32.totalorder %s21, 0
      %p126 = por %p124, %p125
      %p127 = scmp.ne.s32.totalorder %s115, %s116
      %p128 = scmp.eq.s32.totalorder %s22, 1
      %p129 = por %p127, %p128
      %p131 = scmp.ne.s32.totalorder %s116, %s130
      %p132 = scmp.eq.s32.totalorder %s22, 0
      %p133 = por %p131, %p132
      %s135 = sadd.s32 %s134, 1
      %p138 = scmp.eq.s32.totalorder %s16, 1
      %p139 = scmp.ne.s32.totalorder %s134, %s136
      %p140 = scmp.eq.s32.totalorder %s16, 0
      %p141 = por %p139, %p140
      %p142 = scmp.ne.s32.totalorder %s134, %s136
      %p143 = scmp.eq.s32.totalorder %s21, 1
      %p144 = por %p142, %p143
      %p145 = scmp.ne.s32.totalorder %s136, %s137
      %p146 = scmp.eq.s32.totalorder %s21, 0
      %p147 = por %p145, %p146
      %p148 = scmp.ne.s32.totalorder %s136, %s137
      %p149 = scmp.eq.s32.totalorder %s22, 1
      %p150 = por %p148, %p149
      %p152 = scmp.ne.s32.totalorder %s137, %s151
      %p153 = scmp.eq.s32.totalorder %s22, 0
      %p154 = por %p152, %p153
      %s156 = sadd.s32 %s155, 1
      %p159 = scmp.eq.s32.totalorder %s16, 1
      %p160 = scmp.ne.s32.totalorder %s155, %s157
      %p161 = scmp.eq.s32.totalorder %s16, 0
      %p162 = por %p160, %p161
      %p163 = scmp.ne.s32.totalorder %s155, %s157
      %p164 = scmp.eq.s32.totalorder %s21, 1
      %p165 = por %p163, %p164
      %p166 = scmp.ne.s32.totalorder %s157, %s158
      %p167 = scmp.eq.s32.totalorder %s21, 0
      %p168 = por %p166, %p167
      %p169 = scmp.ne.s32.totalorder %s157, %s158
      %p170 = scmp.eq.s32.totalorder %s22, 1
      %p171 = por %p169, %p170
      %p173 = scmp.ne.s32.totalorder %s158, %s172
      %p174 = scmp.eq.s32.totalorder %s22, 0
      %p175 = por %p173, %p174
      %s176 = ssub.s32 %s16, %s23
      %p177 = scmp.eq.s32.totalorder %s176, 0
      %s179 = sadd.s32 %s178, 1
      %s180 = scalar_select %p177, %s178, %s179
      %p183 = pneg %p177
      %p184 = scmp.eq.s32.totalorder %s16, 1
      %p185 = por %p183, %p184
      %p186 = scmp.ne.s32.totalorder %s178, %s181
      %p187 = scmp.eq.s32.totalorder %s16, 0
      %p188 = por %p186, %p187
      %p189 = scmp.ne.s32.totalorder %s178, %s181
      %p190 = scmp.eq.s32.totalorder %s21, 1
      %p191 = por %p189, %p190
      %p192 = scmp.ne.s32.totalorder %s181, %s182
      %p193 = scmp.eq.s32.totalorder %s21, 0
      %p194 = por %p192, %p193
      %p195 = scmp.ne.s32.totalorder %s181, %s182
      %p196 = scmp.eq.s32.totalorder %s22, 1
      %p197 = por %p195, %p196
      %p199 = scmp.ne.s32.totalorder %s182, %s198
      %p200 = scmp.eq.s32.totalorder %s22, 0
      %p201 = por %p199, %p200
      %p202 = scmp.le.s32.totalorder 1, %s16
      %p203 = scmp.lt.s32.totalorder %s16, 3
      %p204 = pnand %p202, %p203
      %p205 = pneg %p204
      // Predicated region
      $region9: #{tpu_custom_call.1} parent=5 // pred_check
        _
      $region10: #{tpu_custom_call.1} parent=5 // pred_check_branch
        %207 = sbr.rel (%p204) target = $region12
      $region11: #{tpu_custom_call.1} parent=5 // pred_region
        %s208 = ssub.s32 %s16, 1
        // Predicated region
        $region13: #{tpu_custom_call.1} parent=11 // pred_check
          %p209 = pneg %p63
        $region14: #{tpu_custom_call.1} parent=11 // pred_check_branch
          %211 = sbr.rel (%p209) target = $region16
        $region15: #{tpu_custom_call.1} parent=11 // pred_region
          _
        $region16: #{tpu_custom_call.1} parent=11 // pred_fallthru
          _
        // Predicated region
        $region17: #{tpu_custom_call.1} parent=11 // pred_check
          %p212 = pneg %p84
        $region18: #{tpu_custom_call.1} parent=11 // pred_check_branch
          %214 = sbr.rel (%p212) target = $region20
        $region19: #{tpu_custom_call.1} parent=11 // pred_region
          _
        $region20: #{tpu_custom_call.1} parent=11 // pred_fallthru
          _
        // Predicated region
        $region21: #{tpu_custom_call.1} parent=11 // pred_check
          %p215 = pneg %p105
        $region22: #{tpu_custom_call.1} parent=11 // pred_check_branch
          %217 = sbr.rel (%p215) target = $region24
        $region23: #{tpu_custom_call.1} parent=11 // pred_region
          _
        $region24: #{tpu_custom_call.1} parent=11 // pred_fallthru
          _
        // Predicated region
        $region25: #{tpu_custom_call.1} parent=11 // pred_check
          %p218 = pneg %p126
        $region26: #{tpu_custom_call.1} parent=11 // pred_check_branch
          %220 = sbr.rel (%p218) target = $region28
        $region27: #{tpu_custom_call.1} parent=11 // pred_region
          _
        $region28: #{tpu_custom_call.1} parent=11 // pred_fallthru
          _
        // Predicated region
        $region29: #{tpu_custom_call.1} parent=11 // pred_check
          %p221 = pneg %p147
        $region30: #{tpu_custom_call.1} parent=11 // pred_check_branch
          %223 = sbr.rel (%p221) target = $region32
        $region31: #{tpu_custom_call.1} parent=11 // pred_region
          _
        $region32: #{tpu_custom_call.1} parent=11 // pred_fallthru
          _
        // Predicated region
        $region33: #{tpu_custom_call.1} parent=11 // pred_check
          %p224 = pneg %p168
        $region34: #{tpu_custom_call.1} parent=11 // pred_check_branch
          %226 = sbr.rel (%p224) target = $region36
        $region35: #{tpu_custom_call.1} parent=11 // pred_region
          _
        $region36: #{tpu_custom_call.1} parent=11 // pred_fallthru
          _
      $region12: #{tpu_custom_call.1} parent=5 // pred_fallthru
        _
      %p227 = scmp.lt.s32.totalorder %s16, 2
      // Predicated region
      $region37: #{tpu_custom_call.1} parent=5 // pred_check
        %p228 = pneg %p227
      $region38: #{tpu_custom_call.1} parent=5 // pred_check_branch
        %230 = sbr.rel (%p228) target = $region40
      $region39: #{tpu_custom_call.1} parent=5 // pred_region
        // Predicated region
        $region41: #{tpu_custom_call.1} parent=39 // pred_check
          %p231 = pneg %p36
        $region42: #{tpu_custom_call.1} parent=39 // pred_check_branch
          %233 = sbr.rel (%p231) target = $region44
        $region43: #{tpu_custom_call.1} parent=39 // pred_region
          %s234 = sand.u32 %s26, 1
          %s235 = sand.u32 %s26, 1
          %s236 = smul.addr %s235, 32
          %s237 = scalar_lea.vmem [#allocation2], %s236
          %s238 = smul.addr %s16, 8
          %s239 = scalar_lea.vmem %s0, %s238
          // Predicated region
          $region45: #{tpu_custom_call.1} parent=43 // pred_check
            _
          $region46: #{tpu_custom_call.1} parent=43 // pred_check_branch
            %241 = sbr.rel (0) target = $region48
          $region47: #{tpu_custom_call.1} parent=43 // pred_region
            // Predicated region
            $region49: #{tpu_custom_call.1} parent=47 // pred_check
              _
            $region50: #{tpu_custom_call.1} parent=47 // pred_check_branch
              %243 = sbr.rel (0) target = $region52
            $region51: #{tpu_custom_call.1} parent=47 // pred_region
              // Predicated region
              $region64: #{tpu_custom_call.1} parent=51 // pred_check
                _
              $region65: #{tpu_custom_call.1} parent=51 // pred_check_branch
                %264 = sbr.rel (0) target = $region67
              $region66: #{tpu_custom_call.1} parent=51 // pred_region
                loop: start=0, step=1, limit=1
                $region68: #{tpu_custom_call.1} parent=66 // loop_pre_header
                  _
                $region69: #{tpu_custom_call.1} parent=66 // loop_header
                  %s266 = sphi 0, %s270
                  %p267 = scmp.ge.s32.totalorder %s266, 1
                  %s271 = sphi %s239, %s239
                  %s272 = sphi %s237, %s237
                $region70: #{tpu_custom_call.1} parent=66 // loop_header_branch
                  %269 = sbr.rel (%p267) target = $region74
                $region71: #{tpu_custom_call.1} parent=66 // loop_body
                  %v273 = vld [vmem:[%s271] sm:$0xff]
                  %274 = vst [vmem:[%s272] sm:$0xff] %v273
                  %v275 = vld [vmem:[%s271 + $0x10] sm:$0xff]
                  %276 = vst [vmem:[%s272 + $0x8] sm:$0xff] %v275
                  %v277 = vld [vmem:[%s271 + $0x20] sm:$0xff]
                  %278 = vst [vmem:[%s272 + $0x10] sm:$0xff] %v277
                  %v279 = vld [vmem:[%s271 + $0x30] sm:$0xff]
                  %280 = vst [vmem:[%s272 + $0x18] sm:$0xff] %v279
                $region72: #{tpu_custom_call.1} parent=66 // loop_footer
                  %s270 = sadd.s32 1, %s266
                $region73: #{tpu_custom_call.1} parent=66 // loop_footer_branch
                  %265 = sbr.rel target = $region69
                $region74: #{tpu_custom_call.1} parent=66 // loop_exit
                  _
              $region67: #{tpu_custom_call.1} parent=51 // pred_fallthru
                _
              // Predicated region
              $region75: #{tpu_custom_call.1} parent=51 // pred_check
                _
              $region76: #{tpu_custom_call.1} parent=51 // pred_check_branch
                %282 = sbr.rel target = $region78
              $region77: #{tpu_custom_call.1} parent=51 // pred_region
                _
              $region78: #{tpu_custom_call.1} parent=51 // pred_fallthru
                _
            $region52: #{tpu_custom_call.1} parent=47 // pred_fallthru
              _
            // Predicated region
            $region53: #{tpu_custom_call.1} parent=47 // pred_check
              _
            $region54: #{tpu_custom_call.1} parent=47 // pred_check_branch
              %245 = sbr.rel target = $region56
            $region55: #{tpu_custom_call.1} parent=47 // pred_region
              loop: start=0, step=1, limit=1
              $region57: #{tpu_custom_call.1} parent=55 // loop_pre_header
                _
              $region58: #{tpu_custom_call.1} parent=55 // loop_header
                %s248 = sphi 0, %s252
                %p249 = scmp.ge.s32.totalorder %s248, 1
                %s253 = sphi %s239, %s239
                %s254 = sphi %s237, %s237
              $region59: #{tpu_custom_call.1} parent=55 // loop_header_branch
                %251 = sbr.rel (%p249) target = $region63
              $region60: #{tpu_custom_call.1} parent=55 // loop_body
                %v255 = vld [vmem:[%s253] sm:$0xff]
                %256 = vst [vmem:[%s254] sm:$0xff] %v255
                %v257 = vld [vmem:[%s253 + $0x10] sm:$0xff]
                %258 = vst [vmem:[%s254 + $0x8] sm:$0xff] %v257
                %v259 = vld [vmem:[%s253 + $0x20] sm:$0xff]
                %260 = vst [vmem:[%s254 + $0x10] sm:$0xff] %v259
                %v261 = vld [vmem:[%s253 + $0x30] sm:$0xff]
                %262 = vst [vmem:[%s254 + $0x18] sm:$0xff] %v261
              $region61: #{tpu_custom_call.1} parent=55 // loop_footer
                %s252 = sadd.s32 1, %s248
              $region62: #{tpu_custom_call.1} parent=55 // loop_footer_branch
                %247 = sbr.rel target = $region58
              $region63: #{tpu_custom_call.1} parent=55 // loop_exit
                _
            $region56: #{tpu_custom_call.1} parent=47 // pred_fallthru
              _
          $region48: #{tpu_custom_call.1} parent=43 // pred_fallthru
            _
          %283 = vnop
        $region44: #{tpu_custom_call.1} parent=39 // pred_fallthru
          _
      $region40: #{tpu_custom_call.1} parent=5 // pred_fallthru
        _
      %p284 = scmp.le.s32.totalorder 1, %s16
      %p285 = scmp.lt.s32.totalorder %s16, 3
      %p286 = pnand %p284, %p285
      %p287 = pneg %p286
      // Predicated region
      $region79: #{tpu_custom_call.1} parent=5 // pred_check
        _
      $region80: #{tpu_custom_call.1} parent=5 // pred_check_branch
        %289 = sbr.rel (%p286) target = $region82
      $region81: #{tpu_custom_call.1} parent=5 // pred_region
        %s290 = ssub.s32 %s16, 1
        %s291 = sand.u32 %s29, 1
        %s292 = sand.u32 %s29, 1
        %s293 = smul.addr %s292, 32
        %s294 = scalar_lea.vmem [#allocation2], %s293
        // Predicated region
        $region83: #{tpu_custom_call.1} parent=81 // pred_check
          %p295 = pneg %p42
        $region84: #{tpu_custom_call.1} parent=81 // pred_check_branch
          %297 = sbr.rel (%p295) target = $region86
        $region85: #{tpu_custom_call.1} parent=81 // pred_region
          _
        $region86: #{tpu_custom_call.1} parent=81 // pred_fallthru
          _
        %s298 = sand.u32 %s29, 1
        %s299 = sand.u32 %s29, 1
        %s300 = smul.addr %s299, 32
        %s301 = scalar_lea.vmem [#allocation2], %s300
        %p302 = pneg %p42
        %p303 = pneg %p39
        %p304 = pneg %p63
        %p305 = pneg %p60
        %p306 = pneg %p84
        %p307 = pneg %p81
        %p308 = pneg %p105
        %p309 = pneg %p102
        %p310 = pneg %p126
        %p311 = pneg %p123
        %p312 = pneg %p147
        %p313 = pneg %p144
        %p314 = pneg %p168
        %p315 = pneg %p165
        %p316 = pneg %p194
        %p317 = pneg %p191
        %s318 = sand.u32 %s181, 1
        %s319 = scalar_lea.sflag [#allocation4], %s318
        %s320 = sand.u32 %s181, 1
        %s321 = smul.addr %s320, 32
        %s322 = scalar_lea.vmem [#allocation3], %s321
        %v324 = vld [vmem:[%s294] sm:$0xff]
        %v325 = vld [vmem:[%s294 + $0x8] sm:$0xff]
        %v326 = vld [vmem:[%s294 + $0x10] sm:$0xff]
        %v327 = vld [vmem:[%s294 + $0x18] sm:$0xff]
        %v328 = vpack.c.bf16 %v325, %v324
        %v329 = vpack.c.bf16 %v327, %v326
        %v330 = vld [vmem:[%s1] sm:$0xf]
        %v331 = vld [vmem:[%s1 + $0x4] sm:$0xf]
        %v332 = vld [vmem:[%s1 + $0x8] sm:$0xf]
        %v333 = vld [vmem:[%s1 + $0xc] sm:$0xf]
        %v334 = vld [vmem:[%s1 + $0x10] sm:$0xf]
        %v335 = vld [vmem:[%s1 + $0x14] sm:$0xf]
        %v336 = vld [vmem:[%s1 + $0x18] sm:$0xf]
        %v337 = vld [vmem:[%s1 + $0x1c] sm:$0xf]
        %v338 = vld [vmem:[%s2] sm:$0xff]
        %v339 = vld [vmem:[%s2 + $0x8] sm:$0xff]
        %v340 = vld [vmem:[%s2 + $0x10] sm:$0xff]
        %v341 = vld [vmem:[%s2 + $0x18] sm:$0xff]
        %v342 = vld [vmem:[%s2 + $0x20] sm:$0xff]
        %v343 = vld [vmem:[%s2 + $0x28] sm:$0xff]
        %v344 = vld [vmem:[%s2 + $0x30] sm:$0xff]
        %v345 = vld [vmem:[%s2 + $0x38] sm:$0xff]
        %347 = vset.pattern.permute.xlu0 0
        %348 = vperm.xlu0 %347, %v338
        %v349 = vpop.permute.xlu0 %348
        %352 = vset.pattern.permute.xlu0 0
        %353 = vperm.xlu0 %352, %v339
        %v354 = vpop.permute.xlu0 %353
        %357 = vset.pattern.permute.xlu0 0
        %358 = vperm.xlu0 %357, %v340
        %v359 = vpop.permute.xlu0 %358
        %362 = vset.pattern.permute.xlu0 0
        %363 = vperm.xlu0 %362, %v341
        %v364 = vpop.permute.xlu0 %363
        %367 = vset.pattern.permute.xlu0 0
        %368 = vperm.xlu0 %367, %v342
        %v369 = vpop.permute.xlu0 %368
        %372 = vset.pattern.permute.xlu0 0
        %373 = vperm.xlu0 %372, %v343
        %v374 = vpop.permute.xlu0 %373
        %377 = vset.pattern.permute.xlu0 0
        %378 = vperm.xlu0 %377, %v344
        %v379 = vpop.permute.xlu0 %378
        %382 = vset.pattern.permute.xlu0 0
        %383 = vperm.xlu0 %382, %v345
        %v384 = vpop.permute.xlu0 %383
        %v394 = vunpack.c.l.b16 %v330
        %v395 = vunpack.c.l.b16 %v331
        %v396 = vunpack.c.l.b16 %v332
        %v397 = vunpack.c.l.b16 %v333
        %v398 = vunpack.c.l.b16 %v334
        %v399 = vunpack.c.l.b16 %v335
        %v400 = vunpack.c.l.b16 %v336
        %v401 = vunpack.c.l.b16 %v337
        %v402 = vpack.c.b16 %v395, %v394
        %v403 = vpack.c.b16 %v397, %v396
        %v404 = vpack.c.b16 %v399, %v398
        %v405 = vpack.c.b16 %v401, %v400
        %vm406 = vcmask 261120
        %v408 = vsel %vm406, %v402, 0
        %v411 = vsel %vm406, %v403, 0
        %v414 = vsel %vm406, %v404, 0
        %v417 = vsel %vm406, %v405, 0
        %419 = vmatprep.subr.bf16.mxu0 0
        %420 = vmatpush1.bf16.msra.mxu0 %v328
        %421 = vmatprep.subr.bf16.mxu0 0
        %422 = vmatpush1.bf16.msra.mxu0 %v329
        %423 = vmatprep.subr.bf16.mxu0 0
        %424 = vmatpush1.bf16.msra.mxu0 0
        %425 = vmatprep.subr.bf16.mxu0 0
        %426 = vmatpush1.bf16.msra.mxu0 0
        %427 = vmatprep.subr.bf16.mxu0 0
        %428 = vmatpush1.bf16.msra.mxu0 0
        %429 = vmatprep.subr.bf16.mxu0 0
        %430 = vmatpush1.bf16.msra.mxu0 0
        %431 = vmatprep.subr.bf16.mxu0 0
        %432 = vmatpush1.bf16.msra.mxu0 0
        %433 = vmatprep.subr.bf16.mxu0 0
        %434 = vmatpush1.bf16.msra.mxu0 0
        %435 = vmatprep.subr.bf16.mxu0 0
        %436 = vmatpush1.bf16.msra.mxu0 0
        %437 = vmatprep.subr.bf16.mxu0 0
        %438 = vmatpush1.bf16.msra.mxu0 0
        %439 = vmatprep.subr.bf16.mxu0 0
        %440 = vmatpush1.bf16.msra.mxu0 0
        %441 = vmatprep.subr.bf16.mxu0 0
        %442 = vmatpush1.bf16.msra.mxu0 0
        %443 = vmatprep.subr.bf16.mxu0 0
        %444 = vmatpush1.bf16.msra.mxu0 0
        %445 = vmatprep.subr.bf16.mxu0 0
        %446 = vmatpush1.bf16.msra.mxu0 0
        %447 = vmatprep.subr.bf16.mxu0 0
        %448 = vmatpush1.bf16.msra.mxu0 0
        %449 = vmatprep.subr.bf16.mxu0 0
        %450 = vmatpush1.bf16.msra.mxu0 0
        %451 = vmatprep.mubr.bf16.mxu0 0
        %452 = vmatmul.mubr.bf16.gmra.mrb[0].mxu0 %v408
        %v453 = vpop.f32.mrb[0].mxu0
        %v454 = vadd.f32 %v349, %v453
        %v455 = vpop.f32.mrb[0].mxu0
        %v456 = vpop.f32.mrb[0].mxu0
        %v457 = vadd.f32 %v354, %v456
        %v458 = vpop.f32.mrb[0].mxu0
        %459 = vmatprep.mubr.bf16.mxu0 0
        %460 = vmatmul.mubr.bf16.gmra.mrb[0].mxu0 %v411
        %v461 = vpop.f32.mrb[0].mxu0
        %v462 = vadd.f32 %v359, %v461
        %v463 = vpop.f32.mrb[0].mxu0
        %v464 = vpop.f32.mrb[0].mxu0
        %v465 = vadd.f32 %v364, %v464
        %v466 = vpop.f32.mrb[0].mxu0
        %467 = vmatprep.mubr.bf16.mxu0 0
        %468 = vmatmul.mubr.bf16.gmra.mrb[0].mxu0 %v414
        %v469 = vpop.f32.mrb[0].mxu0
        %v470 = vadd.f32 %v369, %v469
        %v471 = vpop.f32.mrb[0].mxu0
        %v472 = vpop.f32.mrb[0].mxu0
        %v473 = vadd.f32 %v374, %v472
        %v474 = vpop.f32.mrb[0].mxu0
        %475 = vmatprep.mubr.bf16.mxu0 0
        %476 = vmatmul.mubr.bf16.gmra.mrb[0].mxu0 %v417
        %v477 = vpop.f32.mrb[0].mxu0
        %v478 = vadd.f32 %v379, %v477
        %v479 = vpop.f32.mrb[0].mxu0
        %v480 = vpop.f32.mrb[0].mxu0
        %v481 = vadd.f32 %v384, %v480
        %v482 = vpop.f32.mrb[0].mxu0
        %483 = vdwg.mxu0
        %v484 = vmax.f32 %v454, 0.0
        %v485 = vmax.f32 %v457, 0.0
        %v486 = vmax.f32 %v462, 0.0
        %v487 = vmax.f32 %v465, 0.0
        %v488 = vmax.f32 %v470, 0.0
        %v489 = vmax.f32 %v473, 0.0
        %v490 = vmax.f32 %v478, 0.0
        %v491 = vmax.f32 %v481, 0.0
        %v492 = vld [vmem:[%s3] sm:$0xf]
        %v493 = vld [vmem:[%s3 + $0x4] sm:$0xf]
        %v494 = vld [vmem:[%s3 + $0x8] sm:$0xf]
        %v495 = vld [vmem:[%s3 + $0xc] sm:$0xf]
        %v496 = vld [vmem:[%s3 + $0x10] sm:$0xf]
        %v497 = vld [vmem:[%s3 + $0x14] sm:$0xf]
        %v498 = vld [vmem:[%s3 + $0x18] sm:$0xf]
        %v499 = vld [vmem:[%s3 + $0x1c] sm:$0xf]
        %v500 = vpack.c.bf16 %v485, %v484
        %v501 = vpack.c.bf16 %v487, %v486
        %v502 = vpack.c.bf16 %v489, %v488
        %v503 = vpack.c.bf16 %v491, %v490
        %v504 = vld [vmem:[%s4] sm:$0xff]
        %v505 = vld [vmem:[%s4 + $0x8] sm:$0xff]
        %v506 = vld [vmem:[%s4 + $0x10] sm:$0xff]
        %v507 = vld [vmem:[%s4 + $0x18] sm:$0xff]
        %v508 = vld [vmem:[%s4 + $0x20] sm:$0xff]
        %v509 = vld [vmem:[%s4 + $0x28] sm:$0xff]
        %v510 = vld [vmem:[%s4 + $0x30] sm:$0xff]
        %v511 = vld [vmem:[%s4 + $0x38] sm:$0xff]
        %513 = vset.pattern.permute.xlu0 0
        %514 = vperm.xlu0 %513, %v504
        %v515 = vpop.permute.xlu0 %514
        %518 = vset.pattern.permute.xlu0 0
        %519 = vperm.xlu0 %518, %v505
        %v520 = vpop.permute.xlu0 %519
        %523 = vset.pattern.permute.xlu0 0
        %524 = vperm.xlu0 %523, %v506
        %v525 = vpop.permute.xlu0 %524
        %528 = vset.pattern.permute.xlu0 0
        %529 = vperm.xlu0 %528, %v507
        %v530 = vpop.permute.xlu0 %529
        %533 = vset.pattern.permute.xlu0 0
        %534 = vperm.xlu0 %533, %v508
        %v535 = vpop.permute.xlu0 %534
        %538 = vset.pattern.permute.xlu0 0
        %539 = vperm.xlu0 %538, %v509
        %v540 = vpop.permute.xlu0 %539
        %543 = vset.pattern.permute.xlu0 0
        %544 = vperm.xlu0 %543, %v510
        %v545 = vpop.permute.xlu0 %544
        %548 = vset.pattern.permute.xlu0 0
        %549 = vperm.xlu0 %548, %v511
        %v550 = vpop.permute.xlu0 %549
        %v560 = vunpack.c.l.b16 %v492
        %v561 = vunpack.c.l.b16 %v493
        %v562 = vunpack.c.l.b16 %v494
        %v563 = vunpack.c.l.b16 %v495
        %v564 = vunpack.c.l.b16 %v496
        %v565 = vunpack.c.l.b16 %v497
        %v566 = vunpack.c.l.b16 %v498
        %v567 = vunpack.c.l.b16 %v499
        %v568 = vpack.c.b16 %v561, %v560
        %v569 = vpack.c.b16 %v563, %v562
        %v570 = vpack.c.b16 %v565, %v564
        %v571 = vpack.c.b16 %v567, %v566
        %vm572 = vcmask 523264
        %v574 = vsel %vm572, %v568, 0
        %v577 = vsel %vm572, %v569, 0
        %v580 = vsel %vm572, %v570, 0
        %v583 = vsel %vm572, %v571, 0
        %585 = vmatprep.subr.bf16.mxu0 0
        %586 = vmatpush1.bf16.msra.mxu0 %v500
        %587 = vmatprep.subr.bf16.mxu0 0
        %588 = vmatpush1.bf16.msra.mxu0 %v501
        %589 = vmatprep.subr.bf16.mxu0 0
        %590 = vmatpush1.bf16.msra.mxu0 %v502
        %591 = vmatprep.subr.bf16.mxu0 0
        %592 = vmatpush1.bf16.msra.mxu0 %v503
        %593 = vmatprep.subr.bf16.mxu0 0
        %594 = vmatpush1.bf16.msra.mxu0 0
        %595 = vmatprep.subr.bf16.mxu0 0
        %596 = vmatpush1.bf16.msra.mxu0 0
        %597 = vmatprep.subr.bf16.mxu0 0
        %598 = vmatpush1.bf16.msra.mxu0 0
        %599 = vmatprep.subr.bf16.mxu0 0
        %600 = vmatpush1.bf16.msra.mxu0 0
        %601 = vmatprep.subr.bf16.mxu0 0
        %602 = vmatpush1.bf16.msra.mxu0 0
        %603 = vmatprep.subr.bf16.mxu0 0
        %604 = vmatpush1.bf16.msra.mxu0 0
        %605 = vmatprep.subr.bf16.mxu0 0
        %606 = vmatpush1.bf16.msra.mxu0 0
        %607 = vmatprep.subr.bf16.mxu0 0
        %608 = vmatpush1.bf16.msra.mxu0 0
        %609 = vmatprep.subr.bf16.mxu0 0
        %610 = vmatpush1.bf16.msra.mxu0 0
        %611 = vmatprep.subr.bf16.mxu0 0
        %612 = vmatpush1.bf16.msra.mxu0 0
        %613 = vmatprep.subr.bf16.mxu0 0
        %614 = vmatpush1.bf16.msra.mxu0 0
        %615 = vmatprep.subr.bf16.mxu0 0
        %616 = vmatpush1.bf16.msra.mxu0 0
        %617 = vmatprep.mubr.bf16.mxu0 0
        %618 = vmatmul.mubr.bf16.gmra.mrb[0].mxu0 %v574
        %v619 = vpop.f32.mrb[0].mxu0
        %v620 = vadd.f32 %v515, %v619
        %v621 = vpop.f32.mrb[0].mxu0
        %v622 = vpop.f32.mrb[0].mxu0
        %v623 = vadd.f32 %v520, %v622
        %v624 = vpop.f32.mrb[0].mxu0
        %625 = vmatprep.mubr.bf16.mxu0 0
        %626 = vmatmul.mubr.bf16.gmra.mrb[0].mxu0 %v577
        %v627 = vpop.f32.mrb[0].mxu0
        %v628 = vadd.f32 %v525, %v627
        %v629 = vpop.f32.mrb[0].mxu0
        %v630 = vpop.f32.mrb[0].mxu0
        %v631 = vadd.f32 %v530, %v630
        %v632 = vpop.f32.mrb[0].mxu0
        %633 = vmatprep.mubr.bf16.mxu0 0
        %634 = vmatmul.mubr.bf16.gmra.mrb[0].mxu0 %v580
        %v635 = vpop.f32.mrb[0].mxu0
        %v636 = vadd.f32 %v535, %v635
        %v637 = vpop.f32.mrb[0].mxu0
        %v638 = vpop.f32.mrb[0].mxu0
        %v639 = vadd.f32 %v540, %v638
        %v640 = vpop.f32.mrb[0].mxu0
        %641 = vmatprep.mubr.bf16.mxu0 0
        %642 = vmatmul.mubr.bf16.gmra.mrb[0].mxu0 %v583
        %v643 = vpop.f32.mrb[0].mxu0
        %v644 = vadd.f32 %v545, %v643
        %v645 = vpop.f32.mrb[0].mxu0
        %v646 = vpop.f32.mrb[0].mxu0
        %v647 = vadd.f32 %v550, %v646
        %v648 = vpop.f32.mrb[0].mxu0
        %649 = vdwg.mxu0
        %v650 = vadd.f32 %v484, %v620
        %v651 = vadd.f32 %v485, %v623
        %v652 = vadd.f32 %v486, %v628
        %v653 = vadd.f32 %v487, %v631
        %v654 = vadd.f32 %v488, %v636
        %v655 = vadd.f32 %v489, %v639
        %v656 = vadd.f32 %v490, %v644
        %v657 = vadd.f32 %v491, %v647
        %v658 = vmax.f32 %v650, 0.0
        %v659 = vmax.f32 %v651, 0.0
        %v660 = vmax.f32 %v652, 0.0
        %v661 = vmax.f32 %v653, 0.0
        %v662 = vmax.f32 %v654, 0.0
        %v663 = vmax.f32 %v655, 0.0
        %v664 = vmax.f32 %v656, 0.0
        %v665 = vmax.f32 %v657, 0.0
        %v666 = vadd.f32 %v650, %v658
        %v667 = vadd.f32 %v651, %v659
        %v668 = vadd.f32 %v652, %v660
        %v669 = vadd.f32 %v653, %v661
        %v670 = vadd.f32 %v654, %v662
        %v671 = vadd.f32 %v655, %v663
        %v672 = vadd.f32 %v656, %v664
        %v673 = vadd.f32 %v657, %v665
        %s674 = scalar_lea.vmem %s3, 32
        %v675 = vld [vmem:[%s674] sm:$0xf]
        %v676 = vld [vmem:[%s674 + $0x4] sm:$0xf]
        %v677 = vld [vmem:[%s674 + $0x8] sm:$0xf]
        %v678 = vld [vmem:[%s674 + $0xc] sm:$0xf]
        %v679 = vld [vmem:[%s674 + $0x10] sm:$0xf]
        %v680 = vld [vmem:[%s674 + $0x14] sm:$0xf]
        %v681 = vld [vmem:[%s674 + $0x18] sm:$0xf]
        %v682 = vld [vmem:[%s674 + $0x1c] sm:$0xf]
        %v683 = vpack.c.bf16 %v667, %v666
        %v684 = vpack.c.bf16 %v669, %v668
        %v685 = vpack.c.bf16 %v671, %v670
        %v686 = vpack.c.bf16 %v673, %v672
        %s687 = scalar_lea.vmem %s4, 64
        %v688 = vld [vmem:[%s687] sm:$0xff]
        %v689 = vld [vmem:[%s687 + $0x8] sm:$0xff]
        %v690 = vld [vmem:[%s687 + $0x10] sm:$0xff]
        %v691 = vld [vmem:[%s687 + $0x18] sm:$0xff]
        %v692 = vld [vmem:[%s687 + $0x20] sm:$0xff]
        %v693 = vld [vmem:[%s687 + $0x28] sm:$0xff]
        %v694 = vld [vmem:[%s687 + $0x30] sm:$0xff]
        %v695 = vld [vmem:[%s687 + $0x38] sm:$0xff]
        %697 = vset.pattern.permute.xlu0 0
        %698 = vperm.xlu0 %697, %v688
        %v699 = vpop.permute.xlu0 %698
        %702 = vset.pattern.permute.xlu0 0
        %703 = vperm.xlu0 %702, %v689
        %v704 = vpop.permute.xlu0 %703
        %707 = vset.pattern.permute.xlu0 0
        %708 = vperm.xlu0 %707, %v690
        %v709 = vpop.permute.xlu0 %708
        %712 = vset.pattern.permute.xlu0 0
        %713 = vperm.xlu0 %712, %v691
        %v714 = vpop.permute.xlu0 %713
        %717 = vset.pattern.permute.xlu0 0
        %718 = vperm.xlu0 %717, %v692
        %v719 = vpop.permute.xlu0 %718
        %722 = vset.pattern.permute.xlu0 0
        %723 = vperm.xlu0 %722, %v693
        %v724 = vpop.permute.xlu0 %723
        %727 = vset.pattern.permute.xlu0 0
        %728 = vperm.xlu0 %727, %v694
        %v729 = vpop.permute.xlu0 %728
        %732 = vset.pattern.permute.xlu0 0
        %733 = vperm.xlu0 %732, %v695
        %v734 = vpop.permute.xlu0 %733
        %v744 = vunpack.c.l.b16 %v675
        %v745 = vunpack.c.l.b16 %v676
        %v746 = vunpack.c.l.b16 %v677
        %v747 = vunpack.c.l.b16 %v678
        %v748 = vunpack.c.l.b16 %v679
        %v749 = vunpack.c.l.b16 %v680
        %v750 = vunpack.c.l.b16 %v681
        %v751 = vunpack.c.l.b16 %v682
        %v752 = vpack.c.b16 %v745, %v744
        %v753 = vpack.c.b16 %v747, %v746
        %v754 = vpack.c.b16 %v749, %v748
        %v755 = vpack.c.b16 %v751, %v750
        %v757 = vsel %vm572, %v752, 0
        %v760 = vsel %vm572, %v753, 0
        %v763 = vsel %vm572, %v754, 0
        %v766 = vsel %vm572, %v755, 0
        %768 = vmatprep.subr.bf16.mxu0 0
        %769 = vmatpush1.bf16.msra.mxu0 %v683
        %770 = vmatprep.subr.bf16.mxu0 0
        %771 = vmatpush1.bf16.msra.mxu0 %v684
        %772 = vmatprep.subr.bf16.mxu0 0
        %773 = vmatpush1.bf16.msra.mxu0 %v685
        %774 = vmatprep.subr.bf16.mxu0 0
        %775 = vmatpush1.bf16.msra.mxu0 %v686
        %776 = vmatprep.subr.bf16.mxu0 0
        %777 = vmatpush1.bf16.msra.mxu0 0
        %778 = vmatprep.subr.bf16.mxu0 0
        %779 = vmatpush1.bf16.msra.mxu0 0
        %780 = vmatprep.subr.bf16.mxu0 0
        %781 = vmatpush1.bf16.msra.mxu0 0
        %782 = vmatprep.subr.bf16.mxu0 0
        %783 = vmatpush1.bf16.msra.mxu0 0
        %784 = vmatprep.subr.bf16.mxu0 0
        %785 = vmatpush1.bf16.msra.mxu0 0
        %786 = vmatprep.subr.bf16.mxu0 0
        %787 = vmatpush1.bf16.msra.mxu0 0
        %788 = vmatprep.subr.bf16.mxu0 0
        %789 = vmatpush1.bf16.msra.mxu0 0
        %790 = vmatprep.subr.bf16.mxu0 0
        %791 = vmatpush1.bf16.msra.mxu0 0
        %792 = vmatprep.subr.bf16.mxu0 0
        %793 = vmatpush1.bf16.msra.mxu0 0
        %794 = vmatprep.subr.bf16.mxu0 0
        %795 = vmatpush1.bf16.msra.mxu0 0
        %796 = vmatprep.subr.bf16.mxu0 0
        %797 = vmatpush1.bf16.msra.mxu0 0
        %798 = vmatprep.subr.bf16.mxu0 0
        %799 = vmatpush1.bf16.msra.mxu0 0
        %800 = vmatprep.mubr.bf16.mxu0 0
        %801 = vmatmul.mubr.bf16.gmra.mrb[0].mxu0 %v757
        %v802 = vpop.f32.mrb[0].mxu0
        %v803 = vadd.f32 %v699, %v802
        %v804 = vpop.f32.mrb[0].mxu0
        %v805 = vpop.f32.mrb[0].mxu0
        %v806 = vadd.f32 %v704, %v805
        %v807 = vpop.f32.mrb[0].mxu0
        %808 = vmatprep.mubr.bf16.mxu0 0
        %809 = vmatmul.mubr.bf16.gmra.mrb[0].mxu0 %v760
        %v810 = vpop.f32.mrb[0].mxu0
        %v811 = vadd.f32 %v709, %v810
        %v812 = vpop.f32.mrb[0].mxu0
        %v813 = vpop.f32.mrb[0].mxu0
        %v814 = vadd.f32 %v714, %v813
        %v815 = vpop.f32.mrb[0].mxu0
        %816 = vmatprep.mubr.bf16.mxu0 0
        %817 = vmatmul.mubr.bf16.gmra.mrb[0].mxu0 %v763
        %v818 = vpop.f32.mrb[0].mxu0
        %v819 = vadd.f32 %v719, %v818
        %v820 = vpop.f32.mrb[0].mxu0
        %v821 = vpop.f32.mrb[0].mxu0
        %v822 = vadd.f32 %v724, %v821
        %v823 = vpop.f32.mrb[0].mxu0
        %824 = vmatprep.mubr.bf16.mxu0 0
        %825 = vmatmul.mubr.bf16.gmra.mrb[0].mxu0 %v766
        %v826 = vpop.f32.mrb[0].mxu0
        %v827 = vadd.f32 %v729, %v826
        %v828 = vpop.f32.mrb[0].mxu0
        %v829 = vpop.f32.mrb[0].mxu0
        %v830 = vadd.f32 %v734, %v829
        %v831 = vpop.f32.mrb[0].mxu0
        %832 = vdwg.mxu0
        %v833 = vadd.f32 %v666, %v803
        %v834 = vadd.f32 %v667, %v806
        %v835 = vadd.f32 %v668, %v811
        %v836 = vadd.f32 %v669, %v814
        %v837 = vadd.f32 %v670, %v819
        %v838 = vadd.f32 %v671, %v822
        %v839 = vadd.f32 %v672, %v827
        %v840 = vadd.f32 %v673, %v830
        %v841 = vmax.f32 %v833, 0.0
        %v842 = vmax.f32 %v834, 0.0
        %v843 = vmax.f32 %v835, 0.0
        %v844 = vmax.f32 %v836, 0.0
        %v845 = vmax.f32 %v837, 0.0
        %v846 = vmax.f32 %v838, 0.0
        %v847 = vmax.f32 %v839, 0.0
        %v848 = vmax.f32 %v840, 0.0
        %v849 = vadd.f32 %v833, %v841
        %v850 = vadd.f32 %v834, %v842
        %v851 = vadd.f32 %v835, %v843
        %v852 = vadd.f32 %v836, %v844
        %v853 = vadd.f32 %v837, %v845
        %v854 = vadd.f32 %v838, %v846
        %v855 = vadd.f32 %v839, %v847
        %v856 = vadd.f32 %v840, %v848
        %v857 = vld [vmem:[%s5] sm:$0xf]
        %v858 = vld [vmem:[%s5 + $0x4] sm:$0xf]
        %v859 = vld [vmem:[%s5 + $0x8] sm:$0xf]
        %v860 = vld [vmem:[%s5 + $0xc] sm:$0xf]
        %v861 = vpack.c.bf16 %v850, %v849
        %v862 = vpack.c.bf16 %v852, %v851
        %v863 = vpack.c.bf16 %v854, %v853
        %v864 = vpack.c.bf16 %v856, %v855
        %v865 = vld [vmem:[%s6] sm:$0xff]
        %v866 = vld [vmem:[%s6 + $0x8] sm:$0xff]
        %v867 = vld [vmem:[%s6 + $0x10] sm:$0xff]
        %v868 = vld [vmem:[%s6 + $0x18] sm:$0xff]
        %870 = vset.pattern.permute.xlu0 0
        %871 = vperm.xlu0 %870, %v865
        %v872 = vpop.permute.xlu0 %871
        %875 = vset.pattern.permute.xlu0 0
        %876 = vperm.xlu0 %875, %v866
        %v877 = vpop.permute.xlu0 %876
        %880 = vset.pattern.permute.xlu0 0
        %881 = vperm.xlu0 %880, %v867
        %v882 = vpop.permute.xlu0 %881
        %885 = vset.pattern.permute.xlu0 0
        %886 = vperm.xlu0 %885, %v868
        %v887 = vpop.permute.xlu0 %886
        %v893 = vunpack.c.l.b16 %v857
        %v894 = vunpack.c.l.b16 %v858
        %v895 = vunpack.c.l.b16 %v859
        %v896 = vunpack.c.l.b16 %v860
        %v897 = vpack.c.b16 %v894, %v893
        %v898 = vpack.c.b16 %v896, %v895
        %v900 = vsel %vm572, %v897, 0
        %v903 = vsel %vm572, %v898, 0
        %905 = vmatprep.subr.bf16.mxu0 0
        %906 = vmatpush1.bf16.msra.mxu0 %v861
        %907 = vmatprep.subr.bf16.mxu0 0
        %908 = vmatpush1.bf16.msra.mxu0 %v862
        %909 = vmatprep.subr.bf16.mxu0 0
        %910 = vmatpush1.bf16.msra.mxu0 %v863
        %911 = vmatprep.subr.bf16.mxu0 0
        %912 = vmatpush1.bf16.msra.mxu0 %v864
        %913 = vmatprep.subr.bf16.mxu0 0
        %914 = vmatpush1.bf16.msra.mxu0 0
        %915 = vmatprep.subr.bf16.mxu0 0
        %916 = vmatpush1.bf16.msra.mxu0 0
        %917 = vmatprep.subr.bf16.mxu0 0
        %918 = vmatpush1.bf16.msra.mxu0 0
        %919 = vmatprep.subr.bf16.mxu0 0
        %920 = vmatpush1.bf16.msra.mxu0 0
        %921 = vmatprep.subr.bf16.mxu0 0
        %922 = vmatpush1.bf16.msra.mxu0 0
        %923 = vmatprep.subr.bf16.mxu0 0
        %924 = vmatpush1.bf16.msra.mxu0 0
        %925 = vmatprep.subr.bf16.mxu0 0
        %926 = vmatpush1.bf16.msra.mxu0 0
        %927 = vmatprep.subr.bf16.mxu0 0
        %928 = vmatpush1.bf16.msra.mxu0 0
        %929 = vmatprep.subr.bf16.mxu0 0
        %930 = vmatpush1.bf16.msra.mxu0 0
        %931 = vmatprep.subr.bf16.mxu0 0
        %932 = vmatpush1.bf16.msra.mxu0 0
        %933 = vmatprep.subr.bf16.mxu0 0
        %934 = vmatpush1.bf16.msra.mxu0 0
        %935 = vmatprep.subr.bf16.mxu0 0
        %936 = vmatpush1.bf16.msra.mxu0 0
        %937 = vmatprep.mubr.bf16.mxu0 0
        %938 = vmatmul.mubr.bf16.gmra.mrb[0].mxu0 %v900
        %v939 = vpop.f32.mrb[0].mxu0
        %v940 = vadd.f32 %v872, %v939
        %v941 = vpop.f32.mrb[0].mxu0
        %v942 = vpop.f32.mrb[0].mxu0
        %v943 = vadd.f32 %v877, %v942
        %v944 = vpop.f32.mrb[0].mxu0
        %945 = vmatprep.mubr.bf16.mxu0 0
        %946 = vmatmul.mubr.bf16.gmra.mrb[0].mxu0 %v903
        %v947 = vpop.f32.mrb[0].mxu0
        %v948 = vadd.f32 %v882, %v947
        %v949 = vpop.f32.mrb[0].mxu0
        %v950 = vpop.f32.mrb[0].mxu0
        %v951 = vadd.f32 %v887, %v950
        %v952 = vpop.f32.mrb[0].mxu0
        %953 = vdwg.mxu0
        %v954 = vadd.f32 %v324, %v940
        %v955 = vadd.f32 %v325, %v943
        %v956 = vadd.f32 %v326, %v948
        %v957 = vadd.f32 %v327, %v951
        %v958 = vmul.f32 %v954, 0.5
        %v959 = vmul.f32 %v955, 0.5
        %v960 = vmul.f32 %v956, 0.5
        %v961 = vmul.f32 %v957, 0.5
        %962 = vst [vmem:[%s322] sm:$0xff] %v958
        %963 = vst [vmem:[%s322 + $0x8] sm:$0xff] %v959
        %964 = vst [vmem:[%s322 + $0x10] sm:$0xff] %v960
        %965 = vst [vmem:[%s322 + $0x18] sm:$0xff] %v961
        %s966 = sand.u32 %s181, 1
        %s967 = scalar_lea.sflag [#allocation4], %s966
        %s968 = sand.u32 %s181, 1
        %s969 = smul.addr %s968, 32
        %s970 = scalar_lea.vmem [#allocation3], %s969
        // Predicated region
        $region87: #{tpu_custom_call.1} parent=81 // pred_check
          %p971 = pneg %p191
        $region88: #{tpu_custom_call.1} parent=81 // pred_check_branch
          %973 = sbr.rel (%p971) target = $region90
        $region89: #{tpu_custom_call.1} parent=81 // pred_region
          %s975 = ssub.s32 512, 512
          %976 = vsyncadd %s967, %s975
          %s977 = smul.addr %s21, 128
          %s978 = scalar_lea.hbm %s7, %s977
          %s979 = sshll.u32 %s970, 4
          %s980 = int_to_ptr.vmem [resolvable:$true] %s979
          %985 = dma.vmem_to_hbm [thread:$0]  %s980, 512, %s978, %s967, 128, 256, 8
        $region90: #{tpu_custom_call.1} parent=81 // pred_fallthru
          _
      $region82: #{tpu_custom_call.1} parent=5 // pred_fallthru
        _
      %p986 = scmp.le.s32.totalorder 2, %s16
      // Predicated region
      $region91: #{tpu_custom_call.1} parent=5 // pred_check
        %p987 = pneg %p986
      $region92: #{tpu_custom_call.1} parent=5 // pred_check_branch
        %989 = sbr.rel (%p987) target = $region94
      $region93: #{tpu_custom_call.1} parent=5 // pred_region
        %s990 = ssub.s32 %s16, 2
        // Predicated region
        $region95: #{tpu_custom_call.1} parent=93 // pred_check
          %p991 = pneg %p197
        $region96: #{tpu_custom_call.1} parent=93 // pred_check_branch
          %993 = sbr.rel (%p991) target = $region98
        $region97: #{tpu_custom_call.1} parent=93 // pred_region
          %s994 = sand.u32 %s182, 1
          %s995 = scalar_lea.sflag [#allocation4], %s994
          %s996 = sand.u32 %s182, 1
          %s997 = smul.addr %s996, 32
          %s998 = scalar_lea.vmem [#allocation3], %s997
          %999 = dma.done %s995, 512
        $region98: #{tpu_custom_call.1} parent=93 // pred_fallthru
          _
      $region94: #{tpu_custom_call.1} parent=5 // pred_fallthru
        _
    $region6: #{tpu_custom_call.1} parent=1 // loop_footer
      %s20 = sadd.s32 1, %s16
    $region7: #{tpu_custom_call.1} parent=1 // loop_footer_branch
      %15 = sbr.rel target = $region3
    $region8: #{tpu_custom_call.1} parent=1 // loop_exit
      _
    %1000 = vsyncpa [#allocation4], 1
    %s1001 = scalar_lea.sflag [#allocation4], 1
    %1002 = vsyncpa %s1001, 1

</llo_original>
